<compile_context>
chip_gen: v7x
topology: tpu7x:2x2x1
jax: 0.10.0
libtpu: 0.0.40
codegen_flags: <defaults>
</compile_context>

<pallas_src>
import functools

import jax
import jax.numpy as jnp
from jax.experimental import pallas as pl
from jax.experimental.pallas import tpu as pltpu

_MIB = 1024 * 1024


def _round_up(v, m):
    return (v + m - 1) // m * m


def _tpu_defaults():
    """Best-effort (tensorcores_per_device, usable VMEM budget in bytes)."""
    try:
        kind = jax.devices()[0].device_kind.lower()
    except Exception:
        kind = ""
    multi_tc = any(tag in kind for tag in ("v7", "v4", "v5p"))
    try:
        vmem_cap = int(pltpu.get_tpu_info().vmem_capacity_bytes)
    except Exception:
        vmem_cap = 64 * _MIB
    budget = max(32 * _MIB, (vmem_cap * 3) // 4)   # 25% headroom for compiler scratch
    if ("v7" in kind) or (not kind):
        budget = min(budget, 48 * _MIB)            # v7x: 64 MiB physical per core
    return (2 if multi_tc else 1), budget


def _vmem_limit(need, budget):
    limit = int(min(max(need, 32 * _MIB), budget))
    return int(need) if need > limit else limit


def _pick_batch_tile(n, item_bytes, block_cap, num_tc):
    divs = [d for d in range(1, n + 1) if n % d == 0]
    fits = [d for d in divs if d * item_bytes <= block_cap] or [1]
    nb = max(fits)
    if num_tc >= 2 and n >= 4:
        # >= 2 grid steps per TensorCore so each core overlaps DMA with compute.
        nb = min(nb, max(d for d in divs if d <= n // 4))
    elif n // nb < 2:
        # Single core: take >= 2 steps for double-buffer overlap, but only if
        # the block stays near the DMA sweet spot.
        better = [d for d in fits if n // d >= 2 and d * item_bytes >= block_cap // 4]
        if better:
            nb = max(better)
    return nb


def _pick_c_tile(c, hw_lanes, itemsize, budget):
    cands = sorted({d for d in range(8, c + 1, 8) if c % d == 0} | {c})
    fits = [d for d in cands if 4 * d * hw_lanes * itemsize <= budget]
    return max(fits) if fits else min(cands)


# ----------------------------- fused single pass -----------------------------


def _fused_kernel(x_ref, w1t_ref, w2t_ref, o_ref, *, hw):
    # x_ref/o_ref: (nb, C, HW)   w1t_ref: (C, Cr) f32   w2t_ref: (Cr, C) f32
    x = x_ref[...]                                           # input dtype, no f32 slab
    nb = x.shape[0]
    s = jnp.sum(x, axis=-1, dtype=jnp.float32)               # (nb, C) f32 accumulate
    mx = jnp.max(x, axis=-1).astype(jnp.float32)             # (nb, C)
    pooled = jnp.concatenate([s * (1.0 / hw), mx], axis=0)   # (2*nb, C)
    h = jnp.maximum(jnp.dot(pooled, w1t_ref[...],
                            preferred_element_type=jnp.float32), 0.0)
    o2 = jnp.dot(h, w2t_ref[...], preferred_element_type=jnp.float32)
    att = jax.nn.sigmoid(o2[:nb] + o2[nb:])                  # (nb, C) f32
    o_ref[...] = x * att[:, :, None].astype(x.dtype)


def _fused_path(x3, w1t, w2t, nb, vmem_budget, donate_input):
    n, c, hw = x3.shape
    cr = w1t.shape[1]
    itemsize = jnp.dtype(x3.dtype).itemsize
    sub = max(8, 32 // itemsize)
    block_vmem = nb * _round_up(c, sub) * _round_up(hw, 128) * itemsize
    weight_vmem = 2 * (w1t.size + w2t.size) * 4
    need = 4 * block_vmem + weight_vmem + 2 * _MIB

    cost = pl.CostEstimate(
        flops=int(3 * n * c * hw + 8 * n * c * cr),
        transcendentals=int(n * c),
        bytes_accessed=int(2 * n * c * hw * itemsize + (w1t.size + w2t.size) * 4))

    return pl.pallas_call(
        functools.partial(_fused_kernel, hw=hw),
        out_shape=jax.ShapeDtypeStruct((n, c, hw), x3.dtype),
        grid_spec=pltpu.PrefetchScalarGridSpec(
            num_scalar_prefetch=0,
            grid=(n // nb,),
            in_specs=[
                pl.BlockSpec((nb, c, hw), lambda i: (i, 0, 0)),
                pl.BlockSpec((c, cr), lambda i: (0, 0)),
                pl.BlockSpec((cr, c), lambda i: (0, 0)),
            ],
            out_specs=pl.BlockSpec((nb, c, hw), lambda i: (i, 0, 0)),
        ),
        compiler_params=pltpu.CompilerParams(
            dimension_semantics=("parallel",),
            vmem_limit_bytes=_vmem_limit(need, vmem_budget),
        ),
        cost_estimate=cost,
        input_output_aliases=({0: 0} if donate_input else {}),
    )(x3, w1t, w2t)


# ------------------- channel-tiled two-pass fallback path -------------------


def _pool_kernel(x_ref, avg_ref, max_ref, *, hw):
    # x_ref: (1, Ct, HW); avg_ref/max_ref: (1, Ct, 1) f32
    x = x_ref[...]
    avg_ref[...] = (jnp.sum(x, axis=-1, dtype=jnp.float32) * (1.0 / hw))[:, :, None]
    max_ref[...] = jnp.max(x, axis=-1).astype(jnp.float32)[:, :, None]


def _apply_kernel(x_ref, att_ref, o_ref):
    x = x_ref[...]
    o_ref[...] = x * att_ref[...].astype(x.dtype)


def _two_pass_path(x3, w1t, w2t, c_tile, vmem_budget):
    n, c, hw = x3.shape
    dtype = x3.dtype
    itemsize = jnp.dtype(dtype).itemsize
    hw_lanes = _round_up(hw, 128)
    margin = 2 * _MIB
    if c_tile is None:
        c_tile = _pick_c_tile(c, hw_lanes, itemsize, max(0, vmem_budget - margin))
    assert c % c_tile == 0 and (c_tile % 8 == 0 or c_tile == c), (c, c_tile)
    n_c = c // c_tile
    block_vmem = c_tile * hw_lanes * itemsize

    # Pass 1: per-channel avg/max pooling over the full spatial extent.
    avg, mx = pl.pallas_call(
        functools.partial(_pool_kernel, hw=hw),
        out_shape=(jax.ShapeDtypeStruct((n, c, 1), jnp.float32),
                   jax.ShapeDtypeStruct((n, c, 1), jnp.float32)),
        grid_spec=pltpu.PrefetchScalarGridSpec(
            num_scalar_prefetch=0,
            grid=(n, n_c),
            in_specs=[pl.BlockSpec((1, c_tile, hw), lambda i, j: (i, j, 0))],
            out_specs=(pl.BlockSpec((1, c_tile, 1), lambda i, j: (i, j, 0)),
                       pl.BlockSpec((1, c_tile, 1), lambda i, j: (i, j, 0))),
        ),
        compiler_params=pltpu.CompilerParams(
            dimension_semantics=("parallel", "parallel"),
            vmem_limit_bytes=_vmem_limit(2 * block_vmem + margin, vmem_budget)),
        cost_estimate=pl.CostEstimate(
            flops=int(2 * n * c * hw), transcendentals=0,
            bytes_accessed=int(n * c * hw * itemsize + 2 * n * c * 4)),
    )(x3)

    # Tiny shared fc + sigmoid on the (N, C) pooled stats; negligible next to
    # the HBM-bound pooling/apply passes, so it is left to XLA on this path.
    def fc(v):
        return jnp.maximum(v @ w1t, 0.0) @ w2t

    att = jax.nn.sigmoid(fc(avg[:, :, 0]) + fc(mx[:, :, 0]))[:, :, None]  # (N, C, 1)

    # Pass 2: out = x * att, channel-tiled, lane axis = full HW.
    return pl.pallas_call(
        _apply_kernel,
        out_shape=jax.ShapeDtypeStruct((n, c, hw), dtype),
        grid_spec=pltpu.PrefetchScalarGridSpec(
            num_scalar_prefetch=0,
            grid=(n, n_c),
            in_specs=[pl.BlockSpec((1, c_tile, hw), lambda i, j: (i, j, 0)),
                      pl.BlockSpec((1, c_tile, 1), lambda i, j: (i, j, 0))],
            out_specs=pl.BlockSpec((1, c_tile, hw), lambda i, j: (i, j, 0)),
        ),
        compiler_params=pltpu.CompilerParams(
            dimension_semantics=("parallel", "parallel"),
            vmem_limit_bytes=_vmem_limit(4 * block_vmem + margin, vmem_budget)),
        cost_estimate=pl.CostEstimate(
            flops=int(n * c * hw), transcendentals=0,
            bytes_accessed=int(2 * n * c * hw * itemsize + n * c * 4)),
    )(x3, att)


# --------------------------------- wrapper ----------------------------------


def channel_attention(x_nchw, w1, w2, *, target_block_bytes=None, two_pass=None,
                      c_tile=None, donate_input=False):
    """CBAM ChannelAttention: x * sigmoid(fc(avg_pool(x)) + fc(max_pool(x))).

    x_nchw: (N, C, H, W) float NCHW input (like the PyTorch module).
    w1: (C // r, C)  -- Conv2d(C, C//r, 1, bias=False).weight squeezed.
    w2: (C, C // r)  -- Conv2d(C//r, C, 1, bias=False).weight squeezed.
    Returns (N, C, H, W).  Note: for sub-f32 inputs the attention is cast to
    the input dtype before the multiply (slightly different rounding than the
    f32-scaled PyTorch reference).
    """
    n, c, h, w = x_nchw.shape
    hw = h * w
    itemsize = jnp.dtype(x_nchw.dtype).itemsize
    sub = max(8, 32 // itemsize)                 # sublane packing per dtype
    item_vmem = _round_up(c, sub) * _round_up(hw, 128) * itemsize

    num_tc, vmem_budget = _tpu_defaults()
    if target_block_bytes is None:
        # Single-TC parts (v5e/v6e): favor bigger ~4 MiB blocks; multi-TC parts
        # (v7x): 2 MiB so the N//4 split still leaves >= 2 steps per core.
        target_block_bytes = 2 * _MIB if num_tc >= 2 else 4 * _MIB

    # Free, contiguous reshape: no pad / slice / relayout round-trips.
    x3 = x_nchw.reshape(n, c, hw)
    # Hoist the fc weight transposes and the matmul-dtype cast out of the kernel.
    w1t = jnp.transpose(w1).astype(jnp.float32)  # (C, Cr)
    w2t = jnp.transpose(w2).astype(jnp.float32)  # (Cr, C)

    weight_vmem = 2 * (w1t.size + w2t.size) * 4
    block_cap = max(0, (vmem_budget - weight_vmem - 2 * _MIB) // 4)
    if two_pass is None:
        two_pass = item_vmem > block_cap         # one (C, HW) slab must fit VMEM

    if two_pass:
        out3 = _two_pass_path(x3, w1t, w2t, c_tile, vmem_budget)
    else:
        nb = _pick_batch_tile(n, item_vmem, min(target_block_bytes, block_cap), num_tc)
        out3 = _fused_path(x3, w1t, w2t, nb, vmem_budget, donate_input)
    return out3.reshape(n, c, h, w)


# -------------------------------- reference ---------------------------------


def _reference(x, w1, w2):
    avg = jnp.mean(x, axis=(2, 3))                       # (N, C)
    mx = jnp.max(x, axis=(2, 3))                         # (N, C)

    def fc(v):
        return jnp.maximum(v @ w1.T, 0.0) @ w2.T

    att = jax.nn.sigmoid(fc(avg) + fc(mx))               # (N, C)
    return x * att[:, :, None, None]


if __name__ == "__main__":
    root = jax.random.PRNGKey(0)
    reduction = 16
    cases = [
        # (N, C, H, W, kwargs)
        (8, 64, 16, 16, {}),                               # fused, HW multiple of 128
        (4, 64, 7, 7, {}),                                 # fused, HW=49: no pad / slice
        (2, 64, 12, 12, dict(two_pass=True, c_tile=16)),   # channel-tiled 2-pass fallback
    ]
    for i, (n, c, h, w, kwargs) in enumerate(cases):
        kx, k1, k2 = jax.random.split(jax.random.fold_in(root, i), 3)
        cr = c // reduction
        x = jax.random.normal(kx, (n, c, h, w), dtype=jnp.float32)
        # Synthetic weights matching Conv2d(C, C//r, 1) / Conv2d(C//r, C, 1), bias=False.
        w1 = jax.random.normal(k1, (cr, c), dtype=jnp.float32) * (1.0 / jnp.sqrt(c))
        w2 = jax.random.normal(k2, (c, cr), dtype=jnp.float32) * (1.0 / jnp.sqrt(cr))

        out = jax.block_until_ready(channel_attention(x, w1, w2, **kwargs))
        ref = jax.block_until_ready(_reference(x, w1, w2))

        assert out.shape == (n, c, h, w)
        assert jnp.allclose(out, ref, atol=1e-5, rtol=1e-5), f"mismatch in case {i}"
    print("KERNEL_OK")
</pallas_src>

<mosaic_0001>
module attributes {stable_mosaic.version = 11 : i64} {
  func.func @_fused_kernel(%arg0: i32, %arg1: memref<8x64x256xf32, #tpu.memory_space<vmem>>, %arg2: memref<64x4xf32, #tpu.memory_space<vmem>>, %arg3: memref<4x64xf32, #tpu.memory_space<vmem>>, %arg4: memref<8x64x256xf32, #tpu.memory_space<vmem>>) attributes {dimension_semantics = [#tpu.dimension_semantics<parallel>], iteration_bounds = array<i64: 1>, scalar_prefetch = 0 : i64, scratch_operands = 0 : i64, tpu.core_type = #tpu.core_type<tc>, window_params = [{transform_indices = @transform_0, window_bounds = array<i64: 8, 64, 256>}, {pipeline_mode = #tpu.pipeline_mode<synchronous>, transform_indices = @transform_1, window_bounds = array<i64: 64, 4>}, {pipeline_mode = #tpu.pipeline_mode<synchronous>, transform_indices = @transform_2, window_bounds = array<i64: 4, 64>}, {transform_indices = @transform_3, window_bounds = array<i64: 8, 64, 256>}]} {
    %c0 = arith.constant 0 : index
    %c0_0 = arith.constant 0 : index
    %c0_1 = arith.constant 0 : index
    %0 = vector.load %arg1[%c0, %c0_0, %c0_1] : memref<8x64x256xf32, #tpu.memory_space<vmem>>, vector<8x64x256xf32>
    %cst = arith.constant dense<0.000000e+00> : vector<8x64xf32>
    %1 = vector.multi_reduction <add>, %0, %cst [2] : vector<8x64x256xf32> to vector<8x64xf32>
    %cst_2 = arith.constant dense<0xFF800000> : vector<8x64xf32>
    %2 = vector.multi_reduction <maximumf>, %0, %cst_2 [2] : vector<8x64x256xf32> to vector<8x64xf32>
    %cst_3 = arith.constant 3.906250e-03 : f32
    %3 = vector.broadcast %cst_3 : f32 to vector<8x64xf32>
    %4 = arith.mulf %1, %3 : vector<8x64xf32>
    %5 = tpu.concatenate %4, %2 in 0 : vector<8x64xf32>, vector<8x64xf32> -> vector<16x64xf32>
    %c0_4 = arith.constant 0 : index
    %c0_5 = arith.constant 0 : index
    %6 = vector.load %arg2[%c0_4, %c0_5] : memref<64x4xf32, #tpu.memory_space<vmem>>, vector<64x4xf32>
    %cst_6 = arith.constant dense<0.000000e+00> : vector<16x4xf32>
    %7 = tpu.matmul %5, %6, %cst_6 {dimension_numbers = #tpu.dot_dimension_numbers<[1], [0], [0], [1], [0, 0, 1, 1], [], []>} : vector<16x64xf32>, vector<64x4xf32>, vector<16x4xf32> -> vector<16x4xf32>
    %cst_7 = arith.constant 0.000000e+00 : f32
    %8 = vector.broadcast %cst_7 : f32 to vector<16x4xf32>
    %9 = arith.maximumf %7, %8 : vector<16x4xf32>
    %c0_8 = arith.constant 0 : index
    %c0_9 = arith.constant 0 : index
    %10 = vector.load %arg3[%c0_8, %c0_9] : memref<4x64xf32, #tpu.memory_space<vmem>>, vector<4x64xf32>
    %cst_10 = arith.constant dense<0.000000e+00> : vector<16x64xf32>
    %11 = tpu.matmul %9, %10, %cst_10 {dimension_numbers = #tpu.dot_dimension_numbers<[1], [0], [0], [1], [0, 0, 1, 1], [], []>} : vector<16x4xf32>, vector<4x64xf32>, vector<16x64xf32> -> vector<16x64xf32>
    %12 = vector.extract_strided_slice %11 {offsets = [0, 0], sizes = [8, 64], strides = [1, 1]} : vector<16x64xf32> to vector<8x64xf32>
    %13 = vector.extract_strided_slice %11 {offsets = [8, 0], sizes = [8, 64], strides = [1, 1]} : vector<16x64xf32> to vector<8x64xf32>
    %14 = arith.addf %12, %13 : vector<8x64xf32>
    %15 = arith.negf %14 : vector<8x64xf32>
    %16 = math.exp %15 : vector<8x64xf32>
    %cst_11 = arith.constant 1.000000e+00 : f32
    %17 = vector.broadcast %cst_11 : f32 to vector<8x64xf32>
    %18 = arith.addf %17, %16 : vector<8x64xf32>
    %19 = arith.divf %17, %18 : vector<8x64xf32>
    %20 = vector.shape_cast %19 : vector<8x64xf32> to vector<8x64x1xf32>
    %21 = vector.broadcast %20 : vector<8x64x1xf32> to vector<8x64x256xf32>
    %22 = arith.mulf %0, %21 : vector<8x64x256xf32>
    %c0_12 = arith.constant 0 : index
    %c0_13 = arith.constant 0 : index
    %c0_14 = arith.constant 0 : index
    %23 = vector.load %arg4[%c0_12, %c0_13, %c0_14] : memref<8x64x256xf32, #tpu.memory_space<vmem>>, vector<8x64x256xf32>
    tpu.vector_store %arg4[%c0_12, %c0_13, %c0_14], %22 {strides = array<i32>} : memref<8x64x256xf32, #tpu.memory_space<vmem>>, vector<8x64x256xf32>,
    return
  }
  func.func @transform_0(%arg0: i32) -> (i32, i32, i32) {
    %c0_i32 = arith.constant 0 : i32
    %c0_i32_0 = arith.constant 0 : i32
    %c0_i32_1 = arith.constant 0 : i32
    return %arg0, %c0_i32, %c0_i32_0 : i32, i32, i32
  }
  func.func @transform_1(%arg0: i32) -> (i32, i32) {
    %c0_i32 = arith.constant 0 : i32
    %c0_i32_0 = arith.constant 0 : i32
    %c0_i32_1 = arith.constant 0 : i32
    return %c0_i32, %c0_i32_0 : i32, i32
  }
  func.func @transform_2(%arg0: i32) -> (i32, i32) {
    %c0_i32 = arith.constant 0 : i32
    %c0_i32_0 = arith.constant 0 : i32
    %c0_i32_1 = arith.constant 0 : i32
    return %c0_i32, %c0_i32_0 : i32, i32
  }
  func.func @transform_3(%arg0: i32) -> (i32, i32, i32) {
    %c0_i32 = arith.constant 0 : i32
    %c0_i32_0 = arith.constant 0 : i32
    %c0_i32_1 = arith.constant 0 : i32
    return %arg0, %c0_i32, %c0_i32_0 : i32, i32, i32
  }
}

</mosaic_0001>

<llo_original>
// kernel: tpu_custom_call.1
$region0: #{tpu_custom_call.1}
  #allocation0 [shape = 'u32[]', space=smem, size = 0x4, offset = 0x4, fixed_abs, tag = 'smem constant byte address 0x4 - core index']
  #allocation1 [shape = 'u32[144,128]{1,0:T(1,128)}', space=vmem, size = 0x12000, scoped, tag = 'internal scratch']
  %s0 = inlined_call_operand.hbm [shape: f32[8,64,256], index: 0, kind: input, shape index: {}]
  %s1 = inlined_call_operand.vmem [shape: f32[64,4], index: 1, kind: input, shape index: {}]
  %s2 = inlined_call_operand.vmem [shape: f32[4,64], index: 2, kind: input, shape index: {}]
  %s3 = inlined_call_operand.hbm [shape: f32[8,64,256], index: 3, kind: output, shape index: {}]
  %s4 = sld [smem:[#allocation0]]
  $region26: #{tpu_custom_call.1} parent=0
    _
  %s6 = ssub.s32 1, %s4
  %s7 = scalar_select 0, %s6, %s4
  $region1: #{tpu_custom_call.1} parent=0
    #allocation2 [shape = 'u8[524288]{0}', space=vmem, size = 0x80000, scoped, tag = 'input window, operand 0, single buffered']
    #allocation3 [shape = 's32[1]{0}', space=sflag, size = 0x4, scoped, tag = 'scoped memory for tpu_custom_call.1']
    #allocation4 [shape = 's32[1]{0}', space=sflag, size = 0x4, scoped, tag = 'scoped memory for tpu_custom_call.1']
    #allocation5 [shape = 'u8[524288]{0}', space=vmem, size = 0x80000, scoped, tag = 'output window, operand 0, single buffered']
    %8 = vsyncpa [#allocation3], 0
    %9 = vsyncpa [#allocation4], 0
    // Predicated region
    $region2: #{tpu_custom_call.1} parent=1 // pred_check
      _
    $region3: #{tpu_custom_call.1} parent=1 // pred_check_branch
      %11 = sbr.rel (0) target = $region5
    $region4: #{tpu_custom_call.1} parent=1 // pred_region
      %s13 = ssub.s32 16384, 16384
      %14 = vsyncadd [#allocation3], %s13
      %s15 = sshll.u32 [#allocation2], 4
      %s16 = int_to_ptr.vmem [resolvable:$true] %s15
      %21 = dma.hbm_to_vmem [thread:$0]  %s0, 16384, %s16, [#allocation3], 256, 256, 16
    $region5: #{tpu_custom_call.1} parent=1 // pred_fallthru
      _
    // Predicated region
    $region6: #{tpu_custom_call.1} parent=1 // pred_check
      _
    $region7: #{tpu_custom_call.1} parent=1 // pred_check_branch
      %23 = sbr.rel (0) target = $region9
    $region8: #{tpu_custom_call.1} parent=1 // pred_region
      _
    $region9: #{tpu_custom_call.1} parent=1 // pred_fallthru
      _
    // Predicated region
    $region10: #{tpu_custom_call.1} parent=1 // pred_check
      _
    $region11: #{tpu_custom_call.1} parent=1 // pred_check_branch
      %25 = sbr.rel (0) target = $region13
    $region12: #{tpu_custom_call.1} parent=1 // pred_region
      _
    $region13: #{tpu_custom_call.1} parent=1 // pred_fallthru
      _
    // Predicated region
    $region14: #{tpu_custom_call.1} parent=1 // pred_check
      _
    $region15: #{tpu_custom_call.1} parent=1 // pred_check_branch
      %27 = sbr.rel (0) target = $region17
    $region16: #{tpu_custom_call.1} parent=1 // pred_region
      %28 = dma.done [#allocation3], 16384
    $region17: #{tpu_custom_call.1} parent=1 // pred_fallthru
      _
    %v29 = vld [vmem:[#allocation2] sm:$0xff]
    %v30 = vld [vmem:[#allocation2 + $0x8] sm:$0xff]
    %v31 = vld [vmem:[#allocation2 + $0x10] sm:$0xff]
    %v32 = vld [vmem:[#allocation2 + $0x18] sm:$0xff]
    %v33 = vld [vmem:[#allocation2 + $0x20] sm:$0xff]
    %v34 = vld [vmem:[#allocation2 + $0x28] sm:$0xff]
    %v35 = vld [vmem:[#allocation2 + $0x30] sm:$0xff]
    %v36 = vld [vmem:[#allocation2 + $0x38] sm:$0xff]
    %v37 = vld [vmem:[#allocation2 + $0x40] sm:$0xff]
    %v38 = vld [vmem:[#allocation2 + $0x48] sm:$0xff]
    %v39 = vld [vmem:[#allocation2 + $0x50] sm:$0xff]
    %v40 = vld [vmem:[#allocation2 + $0x58] sm:$0xff]
    %v41 = vld [vmem:[#allocation2 + $0x60] sm:$0xff]
    %v42 = vld [vmem:[#allocation2 + $0x68] sm:$0xff]
    %v43 = vld [vmem:[#allocation2 + $0x70] sm:$0xff]
    %v44 = vld [vmem:[#allocation2 + $0x78] sm:$0xff]
    %v45 = vld [vmem:[#allocation2 + $0x80] sm:$0xff]
    %v46 = vld [vmem:[#allocation2 + $0x88] sm:$0xff]
    %v47 = vld [vmem:[#allocation2 + $0x90] sm:$0xff]
    %v48 = vld [vmem:[#allocation2 + $0x98] sm:$0xff]
    %v49 = vld [vmem:[#allocation2 + $0xa0] sm:$0xff]
    %v50 = vld [vmem:[#allocation2 + $0xa8] sm:$0xff]
    %v51 = vld [vmem:[#allocation2 + $0xb0] sm:$0xff]
    %v52 = vld [vmem:[#allocation2 + $0xb8] sm:$0xff]
    %v53 = vld [vmem:[#allocation2 + $0xc0] sm:$0xff]
    %v54 = vld [vmem:[#allocation2 + $0xc8] sm:$0xff]
    %v55 = vld [vmem:[#allocation2 + $0xd0] sm:$0xff]
    %v56 = vld [vmem:[#allocation2 + $0xd8] sm:$0xff]
    %v57 = vld [vmem:[#allocation2 + $0xe0] sm:$0xff]
    %v58 = vld [vmem:[#allocation2 + $0xe8] sm:$0xff]
    %v59 = vld [vmem:[#allocation2 + $0xf0] sm:$0xff]
    %v60 = vld [vmem:[#allocation2 + $0xf8] sm:$0xff]
    %v61 = vld [vmem:[#allocation2 + $0x100] sm:$0xff]
    %v62 = vld [vmem:[#allocation2 + $0x108] sm:$0xff]
    %v63 = vld [vmem:[#allocation2 + $0x110] sm:$0xff]
    %v64 = vld [vmem:[#allocation2 + $0x118] sm:$0xff]
    %v65 = vld [vmem:[#allocation2 + $0x120] sm:$0xff]
    %v66 = vld [vmem:[#allocation2 + $0x128] sm:$0xff]
    %v67 = vld [vmem:[#allocation2 + $0x130] sm:$0xff]
    %v68 = vld [vmem:[#allocation2 + $0x138] sm:$0xff]
    %v69 = vld [vmem:[#allocation2 + $0x140] sm:$0xff]
    %v70 = vld [vmem:[#allocation2 + $0x148] sm:$0xff]
    %v71 = vld [vmem:[#allocation2 + $0x150] sm:$0xff]
    %v72 = vld [vmem:[#allocation2 + $0x158] sm:$0xff]
    %v73 = vld [vmem:[#allocation2 + $0x160] sm:$0xff]
    %v74 = vld [vmem:[#allocation2 + $0x168] sm:$0xff]
    %v75 = vld [vmem:[#allocation2 + $0x170] sm:$0xff]
    %v76 = vld [vmem:[#allocation2 + $0x178] sm:$0xff]
    %v77 = vld [vmem:[#allocation2 + $0x180] sm:$0xff]
    %v78 = vld [vmem:[#allocation2 + $0x188] sm:$0xff]
    %v79 = vld [vmem:[#allocation2 + $0x190] sm:$0xff]
    %v80 = vld [vmem:[#allocation2 + $0x198] sm:$0xff]
    %v81 = vld [vmem:[#allocation2 + $0x1a0] sm:$0xff]
    %v82 = vld [vmem:[#allocation2 + $0x1a8] sm:$0xff]
    %v83 = vld [vmem:[#allocation2 + $0x1b0] sm:$0xff]
    %v84 = vld [vmem:[#allocation2 + $0x1b8] sm:$0xff]
    %v85 = vld [vmem:[#allocation2 + $0x1c0] sm:$0xff]
    %v86 = vld [vmem:[#allocation2 + $0x1c8] sm:$0xff]
    %v87 = vld [vmem:[#allocation2 + $0x1d0] sm:$0xff]
    %v88 = vld [vmem:[#allocation2 + $0x1d8] sm:$0xff]
    %v89 = vld [vmem:[#allocation2 + $0x1e0] sm:$0xff]
    %v90 = vld [vmem:[#allocation2 + $0x1e8] sm:$0xff]
    %v91 = vld [vmem:[#allocation2 + $0x1f0] sm:$0xff]
    %v92 = vld [vmem:[#allocation2 + $0x1f8] sm:$0xff]
    %v93 = vld [vmem:[#allocation2 + $0x200] sm:$0xff]
    %v94 = vld [vmem:[#allocation2 + $0x208] sm:$0xff]
    %v95 = vld [vmem:[#allocation2 + $0x210] sm:$0xff]
    %v96 = vld [vmem:[#allocation2 + $0x218] sm:$0xff]
    %v97 = vld [vmem:[#allocation2 + $0x220] sm:$0xff]
    %v98 = vld [vmem:[#allocation2 + $0x228] sm:$0xff]
    %v99 = vld [vmem:[#allocation2 + $0x230] sm:$0xff]
    %v100 = vld [vmem:[#allocation2 + $0x238] sm:$0xff]
    %v101 = vld [vmem:[#allocation2 + $0x240] sm:$0xff]
    %v102 = vld [vmem:[#allocation2 + $0x248] sm:$0xff]
    %v103 = vld [vmem:[#allocation2 + $0x250] sm:$0xff]
    %v104 = vld [vmem:[#allocation2 + $0x258] sm:$0xff]
    %v105 = vld [vmem:[#allocation2 + $0x260] sm:$0xff]
    %v106 = vld [vmem:[#allocation2 + $0x268] sm:$0xff]
    %v107 = vld [vmem:[#allocation2 + $0x270] sm:$0xff]
    %v108 = vld [vmem:[#allocation2 + $0x278] sm:$0xff]
    %v109 = vld [vmem:[#allocation2 + $0x280] sm:$0xff]
    %v110 = vld [vmem:[#allocation2 + $0x288] sm:$0xff]
    %v111 = vld [vmem:[#allocation2 + $0x290] sm:$0xff]
    %v112 = vld [vmem:[#allocation2 + $0x298] sm:$0xff]
    %v113 = vld [vmem:[#allocation2 + $0x2a0] sm:$0xff]
    %v114 = vld [vmem:[#allocation2 + $0x2a8] sm:$0xff]
    %v115 = vld [vmem:[#allocation2 + $0x2b0] sm:$0xff]
    %v116 = vld [vmem:[#allocation2 + $0x2b8] sm:$0xff]
    %v117 = vld [vmem:[#allocation2 + $0x2c0] sm:$0xff]
    %v118 = vld [vmem:[#allocation2 + $0x2c8] sm:$0xff]
    %v119 = vld [vmem:[#allocation2 + $0x2d0] sm:$0xff]
    %v120 = vld [vmem:[#allocation2 + $0x2d8] sm:$0xff]
    %v121 = vld [vmem:[#allocation2 + $0x2e0] sm:$0xff]
    %v122 = vld [vmem:[#allocation2 + $0x2e8] sm:$0xff]
    %v123 = vld [vmem:[#allocation2 + $0x2f0] sm:$0xff]
    %v124 = vld [vmem:[#allocation2 + $0x2f8] sm:$0xff]
    %v125 = vld [vmem:[#allocation2 + $0x300] sm:$0xff]
    %v126 = vld [vmem:[#allocation2 + $0x308] sm:$0xff]
    %v127 = vld [vmem:[#allocation2 + $0x310] sm:$0xff]
    %v128 = vld [vmem:[#allocation2 + $0x318] sm:$0xff]
    %v129 = vld [vmem:[#allocation2 + $0x320] sm:$0xff]
    %v130 = vld [vmem:[#allocation2 + $0x328] sm:$0xff]
    %v131 = vld [vmem:[#allocation2 + $0x330] sm:$0xff]
    %v132 = vld [vmem:[#allocation2 + $0x338] sm:$0xff]
    %v133 = vld [vmem:[#allocation2 + $0x340] sm:$0xff]
    %v134 = vld [vmem:[#allocation2 + $0x348] sm:$0xff]
    %v135 = vld [vmem:[#allocation2 + $0x350] sm:$0xff]
    %v136 = vld [vmem:[#allocation2 + $0x358] sm:$0xff]
    %v137 = vld [vmem:[#allocation2 + $0x360] sm:$0xff]
    %v138 = vld [vmem:[#allocation2 + $0x368] sm:$0xff]
    %v139 = vld [vmem:[#allocation2 + $0x370] sm:$0xff]
    %v140 = vld [vmem:[#allocation2 + $0x378] sm:$0xff]
    %v141 = vld [vmem:[#allocation2 + $0x380] sm:$0xff]
    %v142 = vld [vmem:[#allocation2 + $0x388] sm:$0xff]
    %v143 = vld [vmem:[#allocation2 + $0x390] sm:$0xff]
    %v144 = vld [vmem:[#allocation2 + $0x398] sm:$0xff]
    %v145 = vld [vmem:[#allocation2 + $0x3a0] sm:$0xff]
    %v146 = vld [vmem:[#allocation2 + $0x3a8] sm:$0xff]
    %v147 = vld [vmem:[#allocation2 + $0x3b0] sm:$0xff]
    %v148 = vld [vmem:[#allocation2 + $0x3b8] sm:$0xff]
    %v149 = vld [vmem:[#allocation2 + $0x3c0] sm:$0xff]
    %v150 = vld [vmem:[#allocation2 + $0x3c8] sm:$0xff]
    %v151 = vld [vmem:[#allocation2 + $0x3d0] sm:$0xff]
    %v152 = vld [vmem:[#allocation2 + $0x3d8] sm:$0xff]
    %v153 = vld [vmem:[#allocation2 + $0x3e0] sm:$0xff]
    %v154 = vld [vmem:[#allocation2 + $0x3e8] sm:$0xff]
    %v155 = vld [vmem:[#allocation2 + $0x3f0] sm:$0xff]
    %v156 = vld [vmem:[#allocation2 + $0x3f8] sm:$0xff]
    %v157 = vadd.f32 %v29, %v30
    %158 = vadd.xlane.f32.xlu0 %v157
    %v159 = vpop.xlane.xlu0 %158
    %v160 = vadd.f32 %v31, %v32
    %161 = vadd.xlane.f32.xlu0 %v160
    %v162 = vpop.xlane.xlu0 %161
    %v163 = vadd.f32 %v33, %v34
    %164 = vadd.xlane.f32.xlu0 %v163
    %v165 = vpop.xlane.xlu0 %164
    %v166 = vadd.f32 %v35, %v36
    %167 = vadd.xlane.f32.xlu0 %v166
    %v168 = vpop.xlane.xlu0 %167
    %v169 = vadd.f32 %v37, %v38
    %170 = vadd.xlane.f32.xlu0 %v169
    %v171 = vpop.xlane.xlu0 %170
    %v172 = vadd.f32 %v39, %v40
    %173 = vadd.xlane.f32.xlu0 %v172
    %v174 = vpop.xlane.xlu0 %173
    %v175 = vadd.f32 %v41, %v42
    %176 = vadd.xlane.f32.xlu0 %v175
    %v177 = vpop.xlane.xlu0 %176
    %v178 = vadd.f32 %v43, %v44
    %179 = vadd.xlane.f32.xlu0 %v178
    %v180 = vpop.xlane.xlu0 %179
    %v181 = vadd.f32 %v45, %v46
    %182 = vadd.xlane.f32.xlu0 %v181
    %v183 = vpop.xlane.xlu0 %182
    %v184 = vadd.f32 %v47, %v48
    %185 = vadd.xlane.f32.xlu0 %v184
    %v186 = vpop.xlane.xlu0 %185
    %v187 = vadd.f32 %v49, %v50
    %188 = vadd.xlane.f32.xlu0 %v187
    %v189 = vpop.xlane.xlu0 %188
    %v190 = vadd.f32 %v51, %v52
    %191 = vadd.xlane.f32.xlu0 %v190
    %v192 = vpop.xlane.xlu0 %191
    %v193 = vadd.f32 %v53, %v54
    %194 = vadd.xlane.f32.xlu0 %v193
    %v195 = vpop.xlane.xlu0 %194
    %v196 = vadd.f32 %v55, %v56
    %197 = vadd.xlane.f32.xlu0 %v196
    %v198 = vpop.xlane.xlu0 %197
    %v199 = vadd.f32 %v57, %v58
    %200 = vadd.xlane.f32.xlu0 %v199
    %v201 = vpop.xlane.xlu0 %200
    %v202 = vadd.f32 %v59, %v60
    %203 = vadd.xlane.f32.xlu0 %v202
    %v204 = vpop.xlane.xlu0 %203
    %v205 = vadd.f32 %v61, %v62
    %206 = vadd.xlane.f32.xlu0 %v205
    %v207 = vpop.xlane.xlu0 %206
    %v208 = vadd.f32 %v63, %v64
    %209 = vadd.xlane.f32.xlu0 %v208
    %v210 = vpop.xlane.xlu0 %209
    %v211 = vadd.f32 %v65, %v66
    %212 = vadd.xlane.f32.xlu0 %v211
    %v213 = vpop.xlane.xlu0 %212
    %v214 = vadd.f32 %v67, %v68
    %215 = vadd.xlane.f32.xlu0 %v214
    %v216 = vpop.xlane.xlu0 %215
    %v217 = vadd.f32 %v69, %v70
    %218 = vadd.xlane.f32.xlu0 %v217
    %v219 = vpop.xlane.xlu0 %218
    %v220 = vadd.f32 %v71, %v72
    %221 = vadd.xlane.f32.xlu0 %v220
    %v222 = vpop.xlane.xlu0 %221
    %v223 = vadd.f32 %v73, %v74
    %224 = vadd.xlane.f32.xlu0 %v223
    %v225 = vpop.xlane.xlu0 %224
    %v226 = vadd.f32 %v75, %v76
    %227 = vadd.xlane.f32.xlu0 %v226
    %v228 = vpop.xlane.xlu0 %227
    %v229 = vadd.f32 %v77, %v78
    %230 = vadd.xlane.f32.xlu0 %v229
    %v231 = vpop.xlane.xlu0 %230
    %v232 = vadd.f32 %v79, %v80
    %233 = vadd.xlane.f32.xlu0 %v232
    %v234 = vpop.xlane.xlu0 %233
    %v235 = vadd.f32 %v81, %v82
    %236 = vadd.xlane.f32.xlu0 %v235
    %v237 = vpop.xlane.xlu0 %236
    %v238 = vadd.f32 %v83, %v84
    %239 = vadd.xlane.f32.xlu0 %v238
    %v240 = vpop.xlane.xlu0 %239
    %v241 = vadd.f32 %v85, %v86
    %242 = vadd.xlane.f32.xlu0 %v241
    %v243 = vpop.xlane.xlu0 %242
    %v244 = vadd.f32 %v87, %v88
    %245 = vadd.xlane.f32.xlu0 %v244
    %v246 = vpop.xlane.xlu0 %245
    %v247 = vadd.f32 %v89, %v90
    %248 = vadd.xlane.f32.xlu0 %v247
    %v249 = vpop.xlane.xlu0 %248
    %v250 = vadd.f32 %v91, %v92
    %251 = vadd.xlane.f32.xlu0 %v250
    %v252 = vpop.xlane.xlu0 %251
    %v253 = vadd.f32 %v93, %v94
    %254 = vadd.xlane.f32.xlu0 %v253
    %v255 = vpop.xlane.xlu0 %254
    %v256 = vadd.f32 %v95, %v96
    %257 = vadd.xlane.f32.xlu0 %v256
    %v258 = vpop.xlane.xlu0 %257
    %v259 = vadd.f32 %v97, %v98
    %260 = vadd.xlane.f32.xlu0 %v259
    %v261 = vpop.xlane.xlu0 %260
    %v262 = vadd.f32 %v99, %v100
    %263 = vadd.xlane.f32.xlu0 %v262
    %v264 = vpop.xlane.xlu0 %263
    %v265 = vadd.f32 %v101, %v102
    %266 = vadd.xlane.f32.xlu0 %v265
    %v267 = vpop.xlane.xlu0 %266
    %v268 = vadd.f32 %v103, %v104
    %269 = vadd.xlane.f32.xlu0 %v268
    %v270 = vpop.xlane.xlu0 %269
    %v271 = vadd.f32 %v105, %v106
    %272 = vadd.xlane.f32.xlu0 %v271
    %v273 = vpop.xlane.xlu0 %272
    %v274 = vadd.f32 %v107, %v108
    %275 = vadd.xlane.f32.xlu0 %v274
    %v276 = vpop.xlane.xlu0 %275
    %v277 = vadd.f32 %v109, %v110
    %278 = vadd.xlane.f32.xlu0 %v277
    %v279 = vpop.xlane.xlu0 %278
    %v280 = vadd.f32 %v111, %v112
    %281 = vadd.xlane.f32.xlu0 %v280
    %v282 = vpop.xlane.xlu0 %281
    %v283 = vadd.f32 %v113, %v114
    %284 = vadd.xlane.f32.xlu0 %v283
    %v285 = vpop.xlane.xlu0 %284
    %v286 = vadd.f32 %v115, %v116
    %287 = vadd.xlane.f32.xlu0 %v286
    %v288 = vpop.xlane.xlu0 %287
    %v289 = vadd.f32 %v117, %v118
    %290 = vadd.xlane.f32.xlu0 %v289
    %v291 = vpop.xlane.xlu0 %290
    %v292 = vadd.f32 %v119, %v120
    %293 = vadd.xlane.f32.xlu0 %v292
    %v294 = vpop.xlane.xlu0 %293
    %v295 = vadd.f32 %v121, %v122
    %296 = vadd.xlane.f32.xlu0 %v295
    %v297 = vpop.xlane.xlu0 %296
    %v298 = vadd.f32 %v123, %v124
    %299 = vadd.xlane.f32.xlu0 %v298
    %v300 = vpop.xlane.xlu0 %299
    %v301 = vadd.f32 %v125, %v126
    %302 = vadd.xlane.f32.xlu0 %v301
    %v303 = vpop.xlane.xlu0 %302
    %v304 = vadd.f32 %v127, %v128
    %305 = vadd.xlane.f32.xlu0 %v304
    %v306 = vpop.xlane.xlu0 %305
    %v307 = vadd.f32 %v129, %v130
    %308 = vadd.xlane.f32.xlu0 %v307
    %v309 = vpop.xlane.xlu0 %308
    %v310 = vadd.f32 %v131, %v132
    %311 = vadd.xlane.f32.xlu0 %v310
    %v312 = vpop.xlane.xlu0 %311
    %v313 = vadd.f32 %v133, %v134
    %314 = vadd.xlane.f32.xlu0 %v313
    %v315 = vpop.xlane.xlu0 %314
    %v316 = vadd.f32 %v135, %v136
    %317 = vadd.xlane.f32.xlu0 %v316
    %v318 = vpop.xlane.xlu0 %317
    %v319 = vadd.f32 %v137, %v138
    %320 = vadd.xlane.f32.xlu0 %v319
    %v321 = vpop.xlane.xlu0 %320
    %v322 = vadd.f32 %v139, %v140
    %323 = vadd.xlane.f32.xlu0 %v322
    %v324 = vpop.xlane.xlu0 %323
    %v325 = vadd.f32 %v141, %v142
    %326 = vadd.xlane.f32.xlu0 %v325
    %v327 = vpop.xlane.xlu0 %326
    %v328 = vadd.f32 %v143, %v144
    %329 = vadd.xlane.f32.xlu0 %v328
    %v330 = vpop.xlane.xlu0 %329
    %v331 = vadd.f32 %v145, %v146
    %332 = vadd.xlane.f32.xlu0 %v331
    %v333 = vpop.xlane.xlu0 %332
    %v334 = vadd.f32 %v147, %v148
    %335 = vadd.xlane.f32.xlu0 %v334
    %v336 = vpop.xlane.xlu0 %335
    %v337 = vadd.f32 %v149, %v150
    %338 = vadd.xlane.f32.xlu0 %v337
    %v339 = vpop.xlane.xlu0 %338
    %v340 = vadd.f32 %v151, %v152
    %341 = vadd.xlane.f32.xlu0 %v340
    %v342 = vpop.xlane.xlu0 %341
    %v343 = vadd.f32 %v153, %v154
    %344 = vadd.xlane.f32.xlu0 %v343
    %v345 = vpop.xlane.xlu0 %344
    %v346 = vadd.f32 %v155, %v156
    %347 = vadd.xlane.f32.xlu0 %v346
    %v348 = vpop.xlane.xlu0 %347
    %v349 = vmax.f32 %v29, %v30
    %350 = vmax.xlane.f32.xlu0 %v349
    %v351 = vpop.xlane.xlu0 %350
    %v352 = vmax.f32 %v31, %v32
    %353 = vmax.xlane.f32.xlu0 %v352
    %v354 = vpop.xlane.xlu0 %353
    %v355 = vmax.f32 %v33, %v34
    %356 = vmax.xlane.f32.xlu0 %v355
    %v357 = vpop.xlane.xlu0 %356
    %v358 = vmax.f32 %v35, %v36
    %359 = vmax.xlane.f32.xlu0 %v358
    %v360 = vpop.xlane.xlu0 %359
    %v361 = vmax.f32 %v37, %v38
    %362 = vmax.xlane.f32.xlu0 %v361
    %v363 = vpop.xlane.xlu0 %362
    %v364 = vmax.f32 %v39, %v40
    %365 = vmax.xlane.f32.xlu0 %v364
    %v366 = vpop.xlane.xlu0 %365
    %v367 = vmax.f32 %v41, %v42
    %368 = vmax.xlane.f32.xlu0 %v367
    %v369 = vpop.xlane.xlu0 %368
    %v370 = vmax.f32 %v43, %v44
    %371 = vmax.xlane.f32.xlu0 %v370
    %v372 = vpop.xlane.xlu0 %371
    %v373 = vmax.f32 %v45, %v46
    %374 = vmax.xlane.f32.xlu0 %v373
    %v375 = vpop.xlane.xlu0 %374
    %v376 = vmax.f32 %v47, %v48
    %377 = vmax.xlane.f32.xlu0 %v376
    %v378 = vpop.xlane.xlu0 %377
    %v379 = vmax.f32 %v49, %v50
    %380 = vmax.xlane.f32.xlu0 %v379
    %v381 = vpop.xlane.xlu0 %380
    %v382 = vmax.f32 %v51, %v52
    %383 = vmax.xlane.f32.xlu0 %v382
    %v384 = vpop.xlane.xlu0 %383
    %v385 = vmax.f32 %v53, %v54
    %386 = vmax.xlane.f32.xlu0 %v385
    %v387 = vpop.xlane.xlu0 %386
    %v388 = vmax.f32 %v55, %v56
    %389 = vmax.xlane.f32.xlu0 %v388
    %v390 = vpop.xlane.xlu0 %389
    %v391 = vmax.f32 %v57, %v58
    %392 = vmax.xlane.f32.xlu0 %v391
    %v393 = vpop.xlane.xlu0 %392
    %v394 = vmax.f32 %v59, %v60
    %395 = vmax.xlane.f32.xlu0 %v394
    %v396 = vpop.xlane.xlu0 %395
    %v397 = vmax.f32 %v61, %v62
    %398 = vmax.xlane.f32.xlu0 %v397
    %v399 = vpop.xlane.xlu0 %398
    %v400 = vmax.f32 %v63, %v64
    %401 = vmax.xlane.f32.xlu0 %v400
    %v402 = vpop.xlane.xlu0 %401
    %v403 = vmax.f32 %v65, %v66
    %404 = vmax.xlane.f32.xlu0 %v403
    %v405 = vpop.xlane.xlu0 %404
    %v406 = vmax.f32 %v67, %v68
    %407 = vmax.xlane.f32.xlu0 %v406
    %v408 = vpop.xlane.xlu0 %407
    %v409 = vmax.f32 %v69, %v70
    %410 = vmax.xlane.f32.xlu0 %v409
    %v411 = vpop.xlane.xlu0 %410
    %v412 = vmax.f32 %v71, %v72
    %413 = vmax.xlane.f32.xlu0 %v412
    %v414 = vpop.xlane.xlu0 %413
    %v415 = vmax.f32 %v73, %v74
    %416 = vmax.xlane.f32.xlu0 %v415
    %v417 = vpop.xlane.xlu0 %416
    %v418 = vmax.f32 %v75, %v76
    %419 = vmax.xlane.f32.xlu0 %v418
    %v420 = vpop.xlane.xlu0 %419
    %v421 = vmax.f32 %v77, %v78
    %422 = vmax.xlane.f32.xlu0 %v421
    %v423 = vpop.xlane.xlu0 %422
    %v424 = vmax.f32 %v79, %v80
    %425 = vmax.xlane.f32.xlu0 %v424
    %v426 = vpop.xlane.xlu0 %425
    %v427 = vmax.f32 %v81, %v82
    %428 = vmax.xlane.f32.xlu0 %v427
    %v429 = vpop.xlane.xlu0 %428
    %v430 = vmax.f32 %v83, %v84
    %431 = vmax.xlane.f32.xlu0 %v430
    %v432 = vpop.xlane.xlu0 %431
    %v433 = vmax.f32 %v85, %v86
    %434 = vmax.xlane.f32.xlu0 %v433
    %v435 = vpop.xlane.xlu0 %434
    %v436 = vmax.f32 %v87, %v88
    %437 = vmax.xlane.f32.xlu0 %v436
    %v438 = vpop.xlane.xlu0 %437
    %v439 = vmax.f32 %v89, %v90
    %440 = vmax.xlane.f32.xlu0 %v439
    %v441 = vpop.xlane.xlu0 %440
    %v442 = vmax.f32 %v91, %v92
    %443 = vmax.xlane.f32.xlu0 %v442
    %v444 = vpop.xlane.xlu0 %443
    %v445 = vmax.f32 %v93, %v94
    %446 = vmax.xlane.f32.xlu0 %v445
    %v447 = vpop.xlane.xlu0 %446
    %v448 = vmax.f32 %v95, %v96
    %449 = vmax.xlane.f32.xlu0 %v448
    %v450 = vpop.xlane.xlu0 %449
    %v451 = vmax.f32 %v97, %v98
    %452 = vmax.xlane.f32.xlu0 %v451
    %v453 = vpop.xlane.xlu0 %452
    %v454 = vmax.f32 %v99, %v100
    %455 = vmax.xlane.f32.xlu0 %v454
    %v456 = vpop.xlane.xlu0 %455
    %v457 = vmax.f32 %v101, %v102
    %458 = vmax.xlane.f32.xlu0 %v457
    %v459 = vpop.xlane.xlu0 %458
    %v460 = vmax.f32 %v103, %v104
    %461 = vmax.xlane.f32.xlu0 %v460
    %v462 = vpop.xlane.xlu0 %461
    %v463 = vmax.f32 %v105, %v106
    %464 = vmax.xlane.f32.xlu0 %v463
    %v465 = vpop.xlane.xlu0 %464
    %v466 = vmax.f32 %v107, %v108
    %467 = vmax.xlane.f32.xlu0 %v466
    %v468 = vpop.xlane.xlu0 %467
    %v469 = vmax.f32 %v109, %v110
    %470 = vmax.xlane.f32.xlu0 %v469
    %v471 = vpop.xlane.xlu0 %470
    %v472 = vmax.f32 %v111, %v112
    %473 = vmax.xlane.f32.xlu0 %v472
    %v474 = vpop.xlane.xlu0 %473
    %v475 = vmax.f32 %v113, %v114
    %476 = vmax.xlane.f32.xlu0 %v475
    %v477 = vpop.xlane.xlu0 %476
    %v478 = vmax.f32 %v115, %v116
    %479 = vmax.xlane.f32.xlu0 %v478
    %v480 = vpop.xlane.xlu0 %479
    %v481 = vmax.f32 %v117, %v118
    %482 = vmax.xlane.f32.xlu0 %v481
    %v483 = vpop.xlane.xlu0 %482
    %v484 = vmax.f32 %v119, %v120
    %485 = vmax.xlane.f32.xlu0 %v484
    %v486 = vpop.xlane.xlu0 %485
    %v487 = vmax.f32 %v121, %v122
    %488 = vmax.xlane.f32.xlu0 %v487
    %v489 = vpop.xlane.xlu0 %488
    %v490 = vmax.f32 %v123, %v124
    %491 = vmax.xlane.f32.xlu0 %v490
    %v492 = vpop.xlane.xlu0 %491
    %v493 = vmax.f32 %v125, %v126
    %494 = vmax.xlane.f32.xlu0 %v493
    %v495 = vpop.xlane.xlu0 %494
    %v496 = vmax.f32 %v127, %v128
    %497 = vmax.xlane.f32.xlu0 %v496
    %v498 = vpop.xlane.xlu0 %497
    %v499 = vmax.f32 %v129, %v130
    %500 = vmax.xlane.f32.xlu0 %v499
    %v501 = vpop.xlane.xlu0 %500
    %v502 = vmax.f32 %v131, %v132
    %503 = vmax.xlane.f32.xlu0 %v502
    %v504 = vpop.xlane.xlu0 %503
    %v505 = vmax.f32 %v133, %v134
    %506 = vmax.xlane.f32.xlu0 %v505
    %v507 = vpop.xlane.xlu0 %506
    %v508 = vmax.f32 %v135, %v136
    %509 = vmax.xlane.f32.xlu0 %v508
    %v510 = vpop.xlane.xlu0 %509
    %v511 = vmax.f32 %v137, %v138
    %512 = vmax.xlane.f32.xlu0 %v511
    %v513 = vpop.xlane.xlu0 %512
    %v514 = vmax.f32 %v139, %v140
    %515 = vmax.xlane.f32.xlu0 %v514
    %v516 = vpop.xlane.xlu0 %515
    %v517 = vmax.f32 %v141, %v142
    %518 = vmax.xlane.f32.xlu0 %v517
    %v519 = vpop.xlane.xlu0 %518
    %v520 = vmax.f32 %v143, %v144
    %521 = vmax.xlane.f32.xlu0 %v520
    %v522 = vpop.xlane.xlu0 %521
    %v523 = vmax.f32 %v145, %v146
    %524 = vmax.xlane.f32.xlu0 %v523
    %v525 = vpop.xlane.xlu0 %524
    %v526 = vmax.f32 %v147, %v148
    %527 = vmax.xlane.f32.xlu0 %v526
    %v528 = vpop.xlane.xlu0 %527
    %v529 = vmax.f32 %v149, %v150
    %530 = vmax.xlane.f32.xlu0 %v529
    %v531 = vpop.xlane.xlu0 %530
    %v532 = vmax.f32 %v151, %v152
    %533 = vmax.xlane.f32.xlu0 %v532
    %v534 = vpop.xlane.xlu0 %533
    %v535 = vmax.f32 %v153, %v154
    %536 = vmax.xlane.f32.xlu0 %v535
    %v537 = vpop.xlane.xlu0 %536
    %v538 = vmax.f32 %v155, %v156
    %539 = vmax.xlane.f32.xlu0 %v538
    %v540 = vpop.xlane.xlu0 %539
    %v541 = vmul.f32 %v159, 0.00390625
    %v542 = vmul.f32 %v162, 0.00390625
    %v543 = vmul.f32 %v165, 0.00390625
    %v544 = vmul.f32 %v168, 0.00390625
    %v545 = vmul.f32 %v171, 0.00390625
    %v546 = vmul.f32 %v174, 0.00390625
    %v547 = vmul.f32 %v177, 0.00390625
    %v548 = vmul.f32 %v180, 0.00390625
    %v549 = vmul.f32 %v183, 0.00390625
    %v550 = vmul.f32 %v186, 0.00390625
    %v551 = vmul.f32 %v189, 0.00390625
    %v552 = vmul.f32 %v192, 0.00390625
    %v553 = vmul.f32 %v195, 0.00390625
    %v554 = vmul.f32 %v198, 0.00390625
    %v555 = vmul.f32 %v201, 0.00390625
    %v556 = vmul.f32 %v204, 0.00390625
    %v557 = vmul.f32 %v207, 0.00390625
    %v558 = vmul.f32 %v210, 0.00390625
    %v559 = vmul.f32 %v213, 0.00390625
    %v560 = vmul.f32 %v216, 0.00390625
    %v561 = vmul.f32 %v219, 0.00390625
    %v562 = vmul.f32 %v222, 0.00390625
    %v563 = vmul.f32 %v225, 0.00390625
    %v564 = vmul.f32 %v228, 0.00390625
    %v565 = vmul.f32 %v231, 0.00390625
    %v566 = vmul.f32 %v234, 0.00390625
    %v567 = vmul.f32 %v237, 0.00390625
    %v568 = vmul.f32 %v240, 0.00390625
    %v569 = vmul.f32 %v243, 0.00390625
    %v570 = vmul.f32 %v246, 0.00390625
    %v571 = vmul.f32 %v249, 0.00390625
    %v572 = vmul.f32 %v252, 0.00390625
    %v573 = vmul.f32 %v255, 0.00390625
    %v574 = vmul.f32 %v258, 0.00390625
    %v575 = vmul.f32 %v261, 0.00390625
    %v576 = vmul.f32 %v264, 0.00390625
    %v577 = vmul.f32 %v267, 0.00390625
    %v578 = vmul.f32 %v270, 0.00390625
    %v579 = vmul.f32 %v273, 0.00390625
    %v580 = vmul.f32 %v276, 0.00390625
    %v581 = vmul.f32 %v279, 0.00390625
    %v582 = vmul.f32 %v282, 0.00390625
    %v583 = vmul.f32 %v285, 0.00390625
    %v584 = vmul.f32 %v288, 0.00390625
    %v585 = vmul.f32 %v291, 0.00390625
    %v586 = vmul.f32 %v294, 0.00390625
    %v587 = vmul.f32 %v297, 0.00390625
    %v588 = vmul.f32 %v300, 0.00390625
    %v589 = vmul.f32 %v303, 0.00390625
    %v590 = vmul.f32 %v306, 0.00390625
    %v591 = vmul.f32 %v309, 0.00390625
    %v592 = vmul.f32 %v312, 0.00390625
    %v593 = vmul.f32 %v315, 0.00390625
    %v594 = vmul.f32 %v318, 0.00390625
    %v595 = vmul.f32 %v321, 0.00390625
    %v596 = vmul.f32 %v324, 0.00390625
    %v597 = vmul.f32 %v327, 0.00390625
    %v598 = vmul.f32 %v330, 0.00390625
    %v599 = vmul.f32 %v333, 0.00390625
    %v600 = vmul.f32 %v336, 0.00390625
    %v601 = vmul.f32 %v339, 0.00390625
    %v602 = vmul.f32 %v342, 0.00390625
    %v603 = vmul.f32 %v345, 0.00390625
    %v604 = vmul.f32 %v348, 0.00390625
    %v669 = vlaneseq
    %v670 = vand.u32 %v669, 127
    %v671 = vlaneseq
    %v672 = vshrl.u32 %v671, 7
    %v673 = vsub.s32 %v670, %v672
    %v674 = vrot.slane %v541, %v673
    %v675 = vadd.s32 %v670, 4294967288
    %v676 = vlaneseq
    %v677 = vshrl.u32 %v676, 7
    %v678 = vsub.s32 %v675, %v677
    %v679 = vrot.slane %v542, %v678
    %vm680 = vcmask 130112
    %v681 = vsel %vm680, %v679, %v674
    %v682 = vadd.s32 %v670, 4294967280
    %v683 = vlaneseq
    %v684 = vshrl.u32 %v683, 7
    %v685 = vsub.s32 %v682, %v684
    %v686 = vrot.slane %v543, %v685
    %vm687 = vcmask 195712
    %v688 = vsel %vm687, %v686, %v681
    %v689 = vadd.s32 %v670, 4294967272
    %v690 = vlaneseq
    %v691 = vshrl.u32 %v690, 7
    %v692 = vsub.s32 %v689, %v691
    %v693 = vrot.slane %v544, %v692
    %vm694 = vcmask 261312
    %v695 = vsel %vm694, %v693, %v688
    %v696 = vadd.s32 %v670, 4294967264
    %v697 = vlaneseq
    %v698 = vshrl.u32 %v697, 7
    %v699 = vsub.s32 %v696, %v698
    %v700 = vrot.slane %v545, %v699
    %vm701 = vcmask 326912
    %v702 = vsel %vm701, %v700, %v695
    %v703 = vadd.s32 %v670, 4294967256
    %v704 = vlaneseq
    %v705 = vshrl.u32 %v704, 7
    %v706 = vsub.s32 %v703, %v705
    %v707 = vrot.slane %v546, %v706
    %vm708 = vcmask 392512
    %v709 = vsel %vm708, %v707, %v702
    %v710 = vadd.s32 %v670, 4294967248
    %v711 = vlaneseq
    %v712 = vshrl.u32 %v711, 7
    %v713 = vsub.s32 %v710, %v712
    %v714 = vrot.slane %v547, %v713
    %vm715 = vcmask 458112
    %v716 = vsel %vm715, %v714, %v709
    %v717 = vadd.s32 %v670, 4294967240
    %v718 = vlaneseq
    %v719 = vshrl.u32 %v718, 7
    %v720 = vsub.s32 %v717, %v719
    %v721 = vrot.slane %v548, %v720
    %vm722 = vcmask 523712
    %v723 = vsel %vm722, %v721, %v716
    %v724 = vlaneseq
    %v725 = vshrl.u32 %v724, 7
    %v726 = vsub.s32 %v670, %v725
    %v727 = vrot.slane %v549, %v726
    %v728 = vlaneseq
    %v729 = vshrl.u32 %v728, 7
    %v730 = vsub.s32 %v675, %v729
    %v731 = vrot.slane %v550, %v730
    %v732 = vsel %vm680, %v731, %v727
    %v733 = vlaneseq
    %v734 = vshrl.u32 %v733, 7
    %v735 = vsub.s32 %v682, %v734
    %v736 = vrot.slane %v551, %v735
    %v737 = vsel %vm687, %v736, %v732
    %v738 = vlaneseq
    %v739 = vshrl.u32 %v738, 7
    %v740 = vsub.s32 %v689, %v739
    %v741 = vrot.slane %v552, %v740
    %v742 = vsel %vm694, %v741, %v737
    %v743 = vlaneseq
    %v744 = vshrl.u32 %v743, 7
    %v745 = vsub.s32 %v696, %v744
    %v746 = vrot.slane %v553, %v745
    %v747 = vsel %vm701, %v746, %v742
    %v748 = vlaneseq
    %v749 = vshrl.u32 %v748, 7
    %v750 = vsub.s32 %v703, %v749
    %v751 = vrot.slane %v554, %v750
    %v752 = vsel %vm708, %v751, %v747
    %v753 = vlaneseq
    %v754 = vshrl.u32 %v753, 7
    %v755 = vsub.s32 %v710, %v754
    %v756 = vrot.slane %v555, %v755
    %v757 = vsel %vm715, %v756, %v752
    %v758 = vlaneseq
    %v759 = vshrl.u32 %v758, 7
    %v760 = vsub.s32 %v717, %v759
    %v761 = vrot.slane %v556, %v760
    %v762 = vsel %vm722, %v761, %v757
    %v763 = vlaneseq
    %v764 = vshrl.u32 %v763, 7
    %v765 = vsub.s32 %v670, %v764
    %v766 = vrot.slane %v557, %v765
    %v767 = vlaneseq
    %v768 = vshrl.u32 %v767, 7
    %v769 = vsub.s32 %v675, %v768
    %v770 = vrot.slane %v558, %v769
    %v771 = vsel %vm680, %v770, %v766
    %v772 = vlaneseq
    %v773 = vshrl.u32 %v772, 7
    %v774 = vsub.s32 %v682, %v773
    %v775 = vrot.slane %v559, %v774
    %v776 = vsel %vm687, %v775, %v771
    %v777 = vlaneseq
    %v778 = vshrl.u32 %v777, 7
    %v779 = vsub.s32 %v689, %v778
    %v780 = vrot.slane %v560, %v779
    %v781 = vsel %vm694, %v780, %v776
    %v782 = vlaneseq
    %v783 = vshrl.u32 %v782, 7
    %v784 = vsub.s32 %v696, %v783
    %v785 = vrot.slane %v561, %v784
    %v786 = vsel %vm701, %v785, %v781
    %v787 = vlaneseq
    %v788 = vshrl.u32 %v787, 7
    %v789 = vsub.s32 %v703, %v788
    %v790 = vrot.slane %v562, %v789
    %v791 = vsel %vm708, %v790, %v786
    %v792 = vlaneseq
    %v793 = vshrl.u32 %v792, 7
    %v794 = vsub.s32 %v710, %v793
    %v795 = vrot.slane %v563, %v794
    %v796 = vsel %vm715, %v795, %v791
    %v797 = vlaneseq
    %v798 = vshrl.u32 %v797, 7
    %v799 = vsub.s32 %v717, %v798
    %v800 = vrot.slane %v564, %v799
    %v801 = vsel %vm722, %v800, %v796
    %v802 = vlaneseq
    %v803 = vshrl.u32 %v802, 7
    %v804 = vsub.s32 %v670, %v803
    %v805 = vrot.slane %v565, %v804
    %v806 = vlaneseq
    %v807 = vshrl.u32 %v806, 7
    %v808 = vsub.s32 %v675, %v807
    %v809 = vrot.slane %v566, %v808
    %v810 = vsel %vm680, %v809, %v805
    %v811 = vlaneseq
    %v812 = vshrl.u32 %v811, 7
    %v813 = vsub.s32 %v682, %v812
    %v814 = vrot.slane %v567, %v813
    %v815 = vsel %vm687, %v814, %v810
    %v816 = vlaneseq
    %v817 = vshrl.u32 %v816, 7
    %v818 = vsub.s32 %v689, %v817
    %v819 = vrot.slane %v568, %v818
    %v820 = vsel %vm694, %v819, %v815
    %v821 = vlaneseq
    %v822 = vshrl.u32 %v821, 7
    %v823 = vsub.s32 %v696, %v822
    %v824 = vrot.slane %v569, %v823
    %v825 = vsel %vm701, %v824, %v820
    %v826 = vlaneseq
    %v827 = vshrl.u32 %v826, 7
    %v828 = vsub.s32 %v703, %v827
    %v829 = vrot.slane %v570, %v828
    %v830 = vsel %vm708, %v829, %v825
    %v831 = vlaneseq
    %v832 = vshrl.u32 %v831, 7
    %v833 = vsub.s32 %v710, %v832
    %v834 = vrot.slane %v571, %v833
    %v835 = vsel %vm715, %v834, %v830
    %v836 = vlaneseq
    %v837 = vshrl.u32 %v836, 7
    %v838 = vsub.s32 %v717, %v837
    %v839 = vrot.slane %v572, %v838
    %v840 = vsel %vm722, %v839, %v835
    %v841 = vlaneseq
    %v842 = vshrl.u32 %v841, 7
    %v843 = vsub.s32 %v670, %v842
    %v844 = vrot.slane %v573, %v843
    %v845 = vlaneseq
    %v846 = vshrl.u32 %v845, 7
    %v847 = vsub.s32 %v675, %v846
    %v848 = vrot.slane %v574, %v847
    %v849 = vsel %vm680, %v848, %v844
    %v850 = vlaneseq
    %v851 = vshrl.u32 %v850, 7
    %v852 = vsub.s32 %v682, %v851
    %v853 = vrot.slane %v575, %v852
    %v854 = vsel %vm687, %v853, %v849
    %v855 = vlaneseq
    %v856 = vshrl.u32 %v855, 7
    %v857 = vsub.s32 %v689, %v856
    %v858 = vrot.slane %v576, %v857
    %v859 = vsel %vm694, %v858, %v854
    %v860 = vlaneseq
    %v861 = vshrl.u32 %v860, 7
    %v862 = vsub.s32 %v696, %v861
    %v863 = vrot.slane %v577, %v862
    %v864 = vsel %vm701, %v863, %v859
    %v865 = vlaneseq
    %v866 = vshrl.u32 %v865, 7
    %v867 = vsub.s32 %v703, %v866
    %v868 = vrot.slane %v578, %v867
    %v869 = vsel %vm708, %v868, %v864
    %v870 = vlaneseq
    %v871 = vshrl.u32 %v870, 7
    %v872 = vsub.s32 %v710, %v871
    %v873 = vrot.slane %v579, %v872
    %v874 = vsel %vm715, %v873, %v869
    %v875 = vlaneseq
    %v876 = vshrl.u32 %v875, 7
    %v877 = vsub.s32 %v717, %v876
    %v878 = vrot.slane %v580, %v877
    %v879 = vsel %vm722, %v878, %v874
    %v880 = vlaneseq
    %v881 = vshrl.u32 %v880, 7
    %v882 = vsub.s32 %v670, %v881
    %v883 = vrot.slane %v581, %v882
    %v884 = vlaneseq
    %v885 = vshrl.u32 %v884, 7
    %v886 = vsub.s32 %v675, %v885
    %v887 = vrot.slane %v582, %v886
    %v888 = vsel %vm680, %v887, %v883
    %v889 = vlaneseq
    %v890 = vshrl.u32 %v889, 7
    %v891 = vsub.s32 %v682, %v890
    %v892 = vrot.slane %v583, %v891
    %v893 = vsel %vm687, %v892, %v888
    %v894 = vlaneseq
    %v895 = vshrl.u32 %v894, 7
    %v896 = vsub.s32 %v689, %v895
    %v897 = vrot.slane %v584, %v896
    %v898 = vsel %vm694, %v897, %v893
    %v899 = vlaneseq
    %v900 = vshrl.u32 %v899, 7
    %v901 = vsub.s32 %v696, %v900
    %v902 = vrot.slane %v585, %v901
    %v903 = vsel %vm701, %v902, %v898
    %v904 = vlaneseq
    %v905 = vshrl.u32 %v904, 7
    %v906 = vsub.s32 %v703, %v905
    %v907 = vrot.slane %v586, %v906
    %v908 = vsel %vm708, %v907, %v903
    %v909 = vlaneseq
    %v910 = vshrl.u32 %v909, 7
    %v911 = vsub.s32 %v710, %v910
    %v912 = vrot.slane %v587, %v911
    %v913 = vsel %vm715, %v912, %v908
    %v914 = vlaneseq
    %v915 = vshrl.u32 %v914, 7
    %v916 = vsub.s32 %v717, %v915
    %v917 = vrot.slane %v588, %v916
    %v918 = vsel %vm722, %v917, %v913
    %v919 = vlaneseq
    %v920 = vshrl.u32 %v919, 7
    %v921 = vsub.s32 %v670, %v920
    %v922 = vrot.slane %v589, %v921
    %v923 = vlaneseq
    %v924 = vshrl.u32 %v923, 7
    %v925 = vsub.s32 %v675, %v924
    %v926 = vrot.slane %v590, %v925
    %v927 = vsel %vm680, %v926, %v922
    %v928 = vlaneseq
    %v929 = vshrl.u32 %v928, 7
    %v930 = vsub.s32 %v682, %v929
    %v931 = vrot.slane %v591, %v930
    %v932 = vsel %vm687, %v931, %v927
    %v933 = vlaneseq
    %v934 = vshrl.u32 %v933, 7
    %v935 = vsub.s32 %v689, %v934
    %v936 = vrot.slane %v592, %v935
    %v937 = vsel %vm694, %v936, %v932
    %v938 = vlaneseq
    %v939 = vshrl.u32 %v938, 7
    %v940 = vsub.s32 %v696, %v939
    %v941 = vrot.slane %v593, %v940
    %v942 = vsel %vm701, %v941, %v937
    %v943 = vlaneseq
    %v944 = vshrl.u32 %v943, 7
    %v945 = vsub.s32 %v703, %v944
    %v946 = vrot.slane %v594, %v945
    %v947 = vsel %vm708, %v946, %v942
    %v948 = vlaneseq
    %v949 = vshrl.u32 %v948, 7
    %v950 = vsub.s32 %v710, %v949
    %v951 = vrot.slane %v595, %v950
    %v952 = vsel %vm715, %v951, %v947
    %v953 = vlaneseq
    %v954 = vshrl.u32 %v953, 7
    %v955 = vsub.s32 %v717, %v954
    %v956 = vrot.slane %v596, %v955
    %v957 = vsel %vm722, %v956, %v952
    %v958 = vlaneseq
    %v959 = vshrl.u32 %v958, 7
    %v960 = vsub.s32 %v670, %v959
    %v961 = vrot.slane %v597, %v960
    %v962 = vlaneseq
    %v963 = vshrl.u32 %v962, 7
    %v964 = vsub.s32 %v675, %v963
    %v965 = vrot.slane %v598, %v964
    %v966 = vsel %vm680, %v965, %v961
    %v967 = vlaneseq
    %v968 = vshrl.u32 %v967, 7
    %v969 = vsub.s32 %v682, %v968
    %v970 = vrot.slane %v599, %v969
    %v971 = vsel %vm687, %v970, %v966
    %v972 = vlaneseq
    %v973 = vshrl.u32 %v972, 7
    %v974 = vsub.s32 %v689, %v973
    %v975 = vrot.slane %v600, %v974
    %v976 = vsel %vm694, %v975, %v971
    %v977 = vlaneseq
    %v978 = vshrl.u32 %v977, 7
    %v979 = vsub.s32 %v696, %v978
    %v980 = vrot.slane %v601, %v979
    %v981 = vsel %vm701, %v980, %v976
    %v982 = vlaneseq
    %v983 = vshrl.u32 %v982, 7
    %v984 = vsub.s32 %v703, %v983
    %v985 = vrot.slane %v602, %v984
    %v986 = vsel %vm708, %v985, %v981
    %v987 = vlaneseq
    %v988 = vshrl.u32 %v987, 7
    %v989 = vsub.s32 %v710, %v988
    %v990 = vrot.slane %v603, %v989
    %v991 = vsel %vm715, %v990, %v986
    %v992 = vlaneseq
    %v993 = vshrl.u32 %v992, 7
    %v994 = vsub.s32 %v717, %v993
    %v995 = vrot.slane %v604, %v994
    %v996 = vsel %vm722, %v995, %v991
    %vm997 = vcmask 1041409
    %v998 = vsel %vm997, %v762, %v723
    %vm999 = vcmask 1042434
    %v1000 = vsel %vm999, %v801, %v998
    %vm1001 = vcmask 1043459
    %v1002 = vsel %vm1001, %v840, %v1000
    %vm1003 = vcmask 1044484
    %v1004 = vsel %vm1003, %v879, %v1002
    %vm1005 = vcmask 1045509
    %v1006 = vsel %vm1005, %v918, %v1004
    %vm1007 = vcmask 1046534
    %v1008 = vsel %vm1007, %v957, %v1006
    %vm1009 = vcmask 1047559
    %v1010 = vsel %vm1009, %v996, %v1008
    %v1075 = vlaneseq
    %v1076 = vshrl.u32 %v1075, 7
    %v1077 = vsub.s32 %v670, %v1076
    %v1078 = vrot.slane %v351, %v1077
    %v1079 = vlaneseq
    %v1080 = vshrl.u32 %v1079, 7
    %v1081 = vsub.s32 %v675, %v1080
    %v1082 = vrot.slane %v354, %v1081
    %v1083 = vsel %vm680, %v1082, %v1078
    %v1084 = vlaneseq
    %v1085 = vshrl.u32 %v1084, 7
    %v1086 = vsub.s32 %v682, %v1085
    %v1087 = vrot.slane %v357, %v1086
    %v1088 = vsel %vm687, %v1087, %v1083
    %v1089 = vlaneseq
    %v1090 = vshrl.u32 %v1089, 7
    %v1091 = vsub.s32 %v689, %v1090
    %v1092 = vrot.slane %v360, %v1091
    %v1093 = vsel %vm694, %v1092, %v1088
    %v1094 = vlaneseq
    %v1095 = vshrl.u32 %v1094, 7
    %v1096 = vsub.s32 %v696, %v1095
    %v1097 = vrot.slane %v363, %v1096
    %v1098 = vsel %vm701, %v1097, %v1093
    %v1099 = vlaneseq
    %v1100 = vshrl.u32 %v1099, 7
    %v1101 = vsub.s32 %v703, %v1100
    %v1102 = vrot.slane %v366, %v1101
    %v1103 = vsel %vm708, %v1102, %v1098
    %v1104 = vlaneseq
    %v1105 = vshrl.u32 %v1104, 7
    %v1106 = vsub.s32 %v710, %v1105
    %v1107 = vrot.slane %v369, %v1106
    %v1108 = vsel %vm715, %v1107, %v1103
    %v1109 = vlaneseq
    %v1110 = vshrl.u32 %v1109, 7
    %v1111 = vsub.s32 %v717, %v1110
    %v1112 = vrot.slane %v372, %v1111
    %v1113 = vsel %vm722, %v1112, %v1108
    %v1114 = vlaneseq
    %v1115 = vshrl.u32 %v1114, 7
    %v1116 = vsub.s32 %v670, %v1115
    %v1117 = vrot.slane %v375, %v1116
    %v1118 = vlaneseq
    %v1119 = vshrl.u32 %v1118, 7
    %v1120 = vsub.s32 %v675, %v1119
    %v1121 = vrot.slane %v378, %v1120
    %v1122 = vsel %vm680, %v1121, %v1117
    %v1123 = vlaneseq
    %v1124 = vshrl.u32 %v1123, 7
    %v1125 = vsub.s32 %v682, %v1124
    %v1126 = vrot.slane %v381, %v1125
    %v1127 = vsel %vm687, %v1126, %v1122
    %v1128 = vlaneseq
    %v1129 = vshrl.u32 %v1128, 7
    %v1130 = vsub.s32 %v689, %v1129
    %v1131 = vrot.slane %v384, %v1130
    %v1132 = vsel %vm694, %v1131, %v1127
    %v1133 = vlaneseq
    %v1134 = vshrl.u32 %v1133, 7
    %v1135 = vsub.s32 %v696, %v1134
    %v1136 = vrot.slane %v387, %v1135
    %v1137 = vsel %vm701, %v1136, %v1132
    %v1138 = vlaneseq
    %v1139 = vshrl.u32 %v1138, 7
    %v1140 = vsub.s32 %v703, %v1139
    %v1141 = vrot.slane %v390, %v1140
    %v1142 = vsel %vm708, %v1141, %v1137
    %v1143 = vlaneseq
    %v1144 = vshrl.u32 %v1143, 7
    %v1145 = vsub.s32 %v710, %v1144
    %v1146 = vrot.slane %v393, %v1145
    %v1147 = vsel %vm715, %v1146, %v1142
    %v1148 = vlaneseq
    %v1149 = vshrl.u32 %v1148, 7
    %v1150 = vsub.s32 %v717, %v1149
    %v1151 = vrot.slane %v396, %v1150
    %v1152 = vsel %vm722, %v1151, %v1147
    %v1153 = vlaneseq
    %v1154 = vshrl.u32 %v1153, 7
    %v1155 = vsub.s32 %v670, %v1154
    %v1156 = vrot.slane %v399, %v1155
    %v1157 = vlaneseq
    %v1158 = vshrl.u32 %v1157, 7
    %v1159 = vsub.s32 %v675, %v1158
    %v1160 = vrot.slane %v402, %v1159
    %v1161 = vsel %vm680, %v1160, %v1156
    %v1162 = vlaneseq
    %v1163 = vshrl.u32 %v1162, 7
    %v1164 = vsub.s32 %v682, %v1163
    %v1165 = vrot.slane %v405, %v1164
    %v1166 = vsel %vm687, %v1165, %v1161
    %v1167 = vlaneseq
    %v1168 = vshrl.u32 %v1167, 7
    %v1169 = vsub.s32 %v689, %v1168
    %v1170 = vrot.slane %v408, %v1169
    %v1171 = vsel %vm694, %v1170, %v1166
    %v1172 = vlaneseq
    %v1173 = vshrl.u32 %v1172, 7
    %v1174 = vsub.s32 %v696, %v1173
    %v1175 = vrot.slane %v411, %v1174
    %v1176 = vsel %vm701, %v1175, %v1171
    %v1177 = vlaneseq
    %v1178 = vshrl.u32 %v1177, 7
    %v1179 = vsub.s32 %v703, %v1178
    %v1180 = vrot.slane %v414, %v1179
    %v1181 = vsel %vm708, %v1180, %v1176
    %v1182 = vlaneseq
    %v1183 = vshrl.u32 %v1182, 7
    %v1184 = vsub.s32 %v710, %v1183
    %v1185 = vrot.slane %v417, %v1184
    %v1186 = vsel %vm715, %v1185, %v1181
    %v1187 = vlaneseq
    %v1188 = vshrl.u32 %v1187, 7
    %v1189 = vsub.s32 %v717, %v1188
    %v1190 = vrot.slane %v420, %v1189
    %v1191 = vsel %vm722, %v1190, %v1186
    %v1192 = vlaneseq
    %v1193 = vshrl.u32 %v1192, 7
    %v1194 = vsub.s32 %v670, %v1193
    %v1195 = vrot.slane %v423, %v1194
    %v1196 = vlaneseq
    %v1197 = vshrl.u32 %v1196, 7
    %v1198 = vsub.s32 %v675, %v1197
    %v1199 = vrot.slane %v426, %v1198
    %v1200 = vsel %vm680, %v1199, %v1195
    %v1201 = vlaneseq
    %v1202 = vshrl.u32 %v1201, 7
    %v1203 = vsub.s32 %v682, %v1202
    %v1204 = vrot.slane %v429, %v1203
    %v1205 = vsel %vm687, %v1204, %v1200
    %v1206 = vlaneseq
    %v1207 = vshrl.u32 %v1206, 7
    %v1208 = vsub.s32 %v689, %v1207
    %v1209 = vrot.slane %v432, %v1208
    %v1210 = vsel %vm694, %v1209, %v1205
    %v1211 = vlaneseq
    %v1212 = vshrl.u32 %v1211, 7
    %v1213 = vsub.s32 %v696, %v1212
    %v1214 = vrot.slane %v435, %v1213
    %v1215 = vsel %vm701, %v1214, %v1210
    %v1216 = vlaneseq
    %v1217 = vshrl.u32 %v1216, 7
    %v1218 = vsub.s32 %v703, %v1217
    %v1219 = vrot.slane %v438, %v1218
    %v1220 = vsel %vm708, %v1219, %v1215
    %v1221 = vlaneseq
    %v1222 = vshrl.u32 %v1221, 7
    %v1223 = vsub.s32 %v710, %v1222
    %v1224 = vrot.slane %v441, %v1223
    %v1225 = vsel %vm715, %v1224, %v1220
    %v1226 = vlaneseq
    %v1227 = vshrl.u32 %v1226, 7
    %v1228 = vsub.s32 %v717, %v1227
    %v1229 = vrot.slane %v444, %v1228
    %v1230 = vsel %vm722, %v1229, %v1225
    %v1231 = vlaneseq
    %v1232 = vshrl.u32 %v1231, 7
    %v1233 = vsub.s32 %v670, %v1232
    %v1234 = vrot.slane %v447, %v1233
    %v1235 = vlaneseq
    %v1236 = vshrl.u32 %v1235, 7
    %v1237 = vsub.s32 %v675, %v1236
    %v1238 = vrot.slane %v450, %v1237
    %v1239 = vsel %vm680, %v1238, %v1234
    %v1240 = vlaneseq
    %v1241 = vshrl.u32 %v1240, 7
    %v1242 = vsub.s32 %v682, %v1241
    %v1243 = vrot.slane %v453, %v1242
    %v1244 = vsel %vm687, %v1243, %v1239
    %v1245 = vlaneseq
    %v1246 = vshrl.u32 %v1245, 7
    %v1247 = vsub.s32 %v689, %v1246
    %v1248 = vrot.slane %v456, %v1247
    %v1249 = vsel %vm694, %v1248, %v1244
    %v1250 = vlaneseq
    %v1251 = vshrl.u32 %v1250, 7
    %v1252 = vsub.s32 %v696, %v1251
    %v1253 = vrot.slane %v459, %v1252
    %v1254 = vsel %vm701, %v1253, %v1249
    %v1255 = vlaneseq
    %v1256 = vshrl.u32 %v1255, 7
    %v1257 = vsub.s32 %v703, %v1256
    %v1258 = vrot.slane %v462, %v1257
    %v1259 = vsel %vm708, %v1258, %v1254
    %v1260 = vlaneseq
    %v1261 = vshrl.u32 %v1260, 7
    %v1262 = vsub.s32 %v710, %v1261
    %v1263 = vrot.slane %v465, %v1262
    %v1264 = vsel %vm715, %v1263, %v1259
    %v1265 = vlaneseq
    %v1266 = vshrl.u32 %v1265, 7
    %v1267 = vsub.s32 %v717, %v1266
    %v1268 = vrot.slane %v468, %v1267
    %v1269 = vsel %vm722, %v1268, %v1264
    %v1270 = vlaneseq
    %v1271 = vshrl.u32 %v1270, 7
    %v1272 = vsub.s32 %v670, %v1271
    %v1273 = vrot.slane %v471, %v1272
    %v1274 = vlaneseq
    %v1275 = vshrl.u32 %v1274, 7
    %v1276 = vsub.s32 %v675, %v1275
    %v1277 = vrot.slane %v474, %v1276
    %v1278 = vsel %vm680, %v1277, %v1273
    %v1279 = vlaneseq
    %v1280 = vshrl.u32 %v1279, 7
    %v1281 = vsub.s32 %v682, %v1280
    %v1282 = vrot.slane %v477, %v1281
    %v1283 = vsel %vm687, %v1282, %v1278
    %v1284 = vlaneseq
    %v1285 = vshrl.u32 %v1284, 7
    %v1286 = vsub.s32 %v689, %v1285
    %v1287 = vrot.slane %v480, %v1286
    %v1288 = vsel %vm694, %v1287, %v1283
    %v1289 = vlaneseq
    %v1290 = vshrl.u32 %v1289, 7
    %v1291 = vsub.s32 %v696, %v1290
    %v1292 = vrot.slane %v483, %v1291
    %v1293 = vsel %vm701, %v1292, %v1288
    %v1294 = vlaneseq
    %v1295 = vshrl.u32 %v1294, 7
    %v1296 = vsub.s32 %v703, %v1295
    %v1297 = vrot.slane %v486, %v1296
    %v1298 = vsel %vm708, %v1297, %v1293
    %v1299 = vlaneseq
    %v1300 = vshrl.u32 %v1299, 7
    %v1301 = vsub.s32 %v710, %v1300
    %v1302 = vrot.slane %v489, %v1301
    %v1303 = vsel %vm715, %v1302, %v1298
    %v1304 = vlaneseq
    %v1305 = vshrl.u32 %v1304, 7
    %v1306 = vsub.s32 %v717, %v1305
    %v1307 = vrot.slane %v492, %v1306
    %v1308 = vsel %vm722, %v1307, %v1303
    %v1309 = vlaneseq
    %v1310 = vshrl.u32 %v1309, 7
    %v1311 = vsub.s32 %v670, %v1310
    %v1312 = vrot.slane %v495, %v1311
    %v1313 = vlaneseq
    %v1314 = vshrl.u32 %v1313, 7
    %v1315 = vsub.s32 %v675, %v1314
    %v1316 = vrot.slane %v498, %v1315
    %v1317 = vsel %vm680, %v1316, %v1312
    %v1318 = vlaneseq
    %v1319 = vshrl.u32 %v1318, 7
    %v1320 = vsub.s32 %v682, %v1319
    %v1321 = vrot.slane %v501, %v1320
    %v1322 = vsel %vm687, %v1321, %v1317
    %v1323 = vlaneseq
    %v1324 = vshrl.u32 %v1323, 7
    %v1325 = vsub.s32 %v689, %v1324
    %v1326 = vrot.slane %v504, %v1325
    %v1327 = vsel %vm694, %v1326, %v1322
    %v1328 = vlaneseq
    %v1329 = vshrl.u32 %v1328, 7
    %v1330 = vsub.s32 %v696, %v1329
    %v1331 = vrot.slane %v507, %v1330
    %v1332 = vsel %vm701, %v1331, %v1327
    %v1333 = vlaneseq
    %v1334 = vshrl.u32 %v1333, 7
    %v1335 = vsub.s32 %v703, %v1334
    %v1336 = vrot.slane %v510, %v1335
    %v1337 = vsel %vm708, %v1336, %v1332
    %v1338 = vlaneseq
    %v1339 = vshrl.u32 %v1338, 7
    %v1340 = vsub.s32 %v710, %v1339
    %v1341 = vrot.slane %v513, %v1340
    %v1342 = vsel %vm715, %v1341, %v1337
    %v1343 = vlaneseq
    %v1344 = vshrl.u32 %v1343, 7
    %v1345 = vsub.s32 %v717, %v1344
    %v1346 = vrot.slane %v516, %v1345
    %v1347 = vsel %vm722, %v1346, %v1342
    %v1348 = vlaneseq
    %v1349 = vshrl.u32 %v1348, 7
    %v1350 = vsub.s32 %v670, %v1349
    %v1351 = vrot.slane %v519, %v1350
    %v1352 = vlaneseq
    %v1353 = vshrl.u32 %v1352, 7
    %v1354 = vsub.s32 %v675, %v1353
    %v1355 = vrot.slane %v522, %v1354
    %v1356 = vsel %vm680, %v1355, %v1351
    %v1357 = vlaneseq
    %v1358 = vshrl.u32 %v1357, 7
    %v1359 = vsub.s32 %v682, %v1358
    %v1360 = vrot.slane %v525, %v1359
    %v1361 = vsel %vm687, %v1360, %v1356
    %v1362 = vlaneseq
    %v1363 = vshrl.u32 %v1362, 7
    %v1364 = vsub.s32 %v689, %v1363
    %v1365 = vrot.slane %v528, %v1364
    %v1366 = vsel %vm694, %v1365, %v1361
    %v1367 = vlaneseq
    %v1368 = vshrl.u32 %v1367, 7
    %v1369 = vsub.s32 %v696, %v1368
    %v1370 = vrot.slane %v531, %v1369
    %v1371 = vsel %vm701, %v1370, %v1366
    %v1372 = vlaneseq
    %v1373 = vshrl.u32 %v1372, 7
    %v1374 = vsub.s32 %v703, %v1373
    %v1375 = vrot.slane %v534, %v1374
    %v1376 = vsel %vm708, %v1375, %v1371
    %v1377 = vlaneseq
    %v1378 = vshrl.u32 %v1377, 7
    %v1379 = vsub.s32 %v710, %v1378
    %v1380 = vrot.slane %v537, %v1379
    %v1381 = vsel %vm715, %v1380, %v1376
    %v1382 = vlaneseq
    %v1383 = vshrl.u32 %v1382, 7
    %v1384 = vsub.s32 %v717, %v1383
    %v1385 = vrot.slane %v540, %v1384
    %v1386 = vsel %vm722, %v1385, %v1381
    %v1387 = vsel %vm997, %v1152, %v1113
    %v1388 = vsel %vm999, %v1191, %v1387
    %v1389 = vsel %vm1001, %v1230, %v1388
    %v1390 = vsel %vm1003, %v1269, %v1389
    %v1391 = vsel %vm1005, %v1308, %v1390
    %v1392 = vsel %vm1007, %v1347, %v1391
    %v1393 = vsel %vm1009, %v1386, %v1392
    %v1394 = vld [vmem:[%s1] sm:$0xff]
    %v1395 = vld [vmem:[%s1 + $0x8] sm:$0xff]
    %v1396 = vld [vmem:[%s1 + $0x10] sm:$0xff]
    %v1397 = vld [vmem:[%s1 + $0x18] sm:$0xff]
    %v1398 = vld [vmem:[%s1 + $0x20] sm:$0xff]
    %v1399 = vld [vmem:[%s1 + $0x28] sm:$0xff]
    %v1400 = vld [vmem:[%s1 + $0x30] sm:$0xff]
    %v1401 = vld [vmem:[%s1 + $0x38] sm:$0xff]
    %vm1402 = vcmask 523264
    %v1403 = vsel %vm1402, %v1010, 0
    %v1405 = vsel %vm1402, %v1393, 0
    %1407 = vmatprep.subr.mxu0 0.0
    %1408 = vmatpush1.msra.mxu0 %v1394
    %1409 = vmatprep.subr.mxu0 0.0
    %1410 = vmatpush1.msra.mxu0 %v1395
    %1411 = vmatprep.subr.mxu0 0.0
    %1412 = vmatpush1.msra.mxu0 %v1396
    %1413 = vmatprep.subr.mxu0 0.0
    %1414 = vmatpush1.msra.mxu0 %v1397
    %1415 = vmatprep.subr.mxu0 0.0
    %1416 = vmatpush1.msra.mxu0 %v1398
    %1417 = vmatprep.subr.mxu0 0.0
    %1418 = vmatpush1.msra.mxu0 %v1399
    %1419 = vmatprep.subr.mxu0 0.0
    %1420 = vmatpush1.msra.mxu0 %v1400
    %1421 = vmatprep.subr.mxu0 0.0
    %1422 = vmatpush1.msra.mxu0 %v1401
    %1423 = vmatprep.subr.mxu0 0.0
    %1424 = vmatpush1.msra.mxu0 0.0
    %1425 = vmatprep.subr.mxu0 0.0
    %1426 = vmatpush1.msra.mxu0 0.0
    %1427 = vmatprep.subr.mxu0 0.0
    %1428 = vmatpush1.msra.mxu0 0.0
    %1429 = vmatprep.subr.mxu0 0.0
    %1430 = vmatpush1.msra.mxu0 0.0
    %1431 = vmatprep.subr.mxu0 0.0
    %1432 = vmatpush1.msra.mxu0 0.0
    %1433 = vmatprep.subr.mxu0 0.0
    %1434 = vmatpush1.msra.mxu0 0.0
    %1435 = vmatprep.subr.mxu0 0.0
    %1436 = vmatpush1.msra.mxu0 0.0
    %1437 = vmatprep.subr.mxu0 0.0
    %1438 = vmatpush1.msra.mxu0 0.0
    %1439 = vmatprep.subr.mxu0 0.0
    %1440 = vmatpush1.msra.mxu0 0.0
    %1441 = vmatprep.subr.mxu0 0.0
    %1442 = vmatpush1.msra.mxu0 0.0
    %1443 = vmatprep.subr.mxu0 0.0
    %1444 = vmatpush1.msra.mxu0 0.0
    %1445 = vmatprep.subr.mxu0 0.0
    %1446 = vmatpush1.msra.mxu0 0.0
    %1447 = vmatprep.subr.mxu0 0.0
    %1448 = vmatpush1.msra.mxu0 0.0
    %1449 = vmatprep.subr.mxu0 0.0
    %1450 = vmatpush1.msra.mxu0 0.0
    %1451 = vmatprep.subr.mxu0 0.0
    %1452 = vmatpush1.msra.mxu0 0.0
    %1453 = vmatprep.subr.mxu0 0.0
    %1454 = vmatpush1.msra.mxu0 0.0
    %1455 = vmatprep.subr.mxu0 0.0
    %1456 = vmatpush1.msra.mxu0 0.0
    %1457 = vmatprep.subr.mxu0 0.0
    %1458 = vmatpush1.msra.mxu0 0.0
    %1459 = vmatprep.subr.mxu0 0.0
    %1460 = vmatpush1.msra.mxu0 0.0
    %1461 = vmatprep.subr.mxu0 0.0
    %1462 = vmatpush1.msra.mxu0 0.0
    %1463 = vmatprep.subr.mxu0 0.0
    %1464 = vmatpush1.msra.mxu0 0.0
    %1465 = vmatprep.subr.mxu0 0.0
    %1466 = vmatpush1.msra.mxu0 0.0
    %1467 = vmatprep.subr.mxu0 0.0
    %1468 = vmatpush1.msra.mxu0 0.0
    %1469 = vmatprep.subr.mxu0 0.0
    %1470 = vmatpush1.msra.mxu0 0.0
    %1471 = vmatprep.mubr.f32.mxu0 0.0
    %1472 = vmatmul.mubr.f32.gmra.mrb[0].mxu0 %v1403
    %v1473 = vpop.f32.mrb[0].mxu0
    %v1474 = vadd.f32 0.0, %v1473
    %v1475 = vpop.f32.mrb[0].mxu0
    %1476 = vmatprep.mubr.f32.mxu0 0.0
    %1477 = vmatmul.mubr.f32.gmra.mrb[0].mxu0 %v1405
    %v1478 = vpop.f32.mrb[0].mxu0
    %v1479 = vadd.f32 0.0, %v1478
    %v1480 = vpop.f32.mrb[0].mxu0
    %1481 = vdwg.mxu0
    %v1482 = vmax.f32 %v1474, 0.0
    %v1483 = vmax.f32 %v1479, 0.0
    %v1484 = vld [vmem:[%s2] sm:$0xf]
    %vm1485 = vcmask 31744
    %v1487 = vsel %vm1485, %v1482, 0
    %v1490 = vsel %vm1485, %v1483, 0
    %vm1492 = vcmask 1043456
    %v1494 = vsel %vm1492, %v1484, 0
    %1496 = vmatprep.subr.mxu0 0.0
    %1497 = vmatpush1.msra.mxu0 %v1494
    %1498 = vmatprep.subr.mxu0 0.0
    %1499 = vmatpush1.msra.mxu0 0.0
    %1500 = vmatprep.subr.mxu0 0.0
    %1501 = vmatpush1.msra.mxu0 0.0
    %1502 = vmatprep.subr.mxu0 0.0
    %1503 = vmatpush1.msra.mxu0 0.0
    %1504 = vmatprep.subr.mxu0 0.0
    %1505 = vmatpush1.msra.mxu0 0.0
    %1506 = vmatprep.subr.mxu0 0.0
    %1507 = vmatpush1.msra.mxu0 0.0
    %1508 = vmatprep.subr.mxu0 0.0
    %1509 = vmatpush1.msra.mxu0 0.0
    %1510 = vmatprep.subr.mxu0 0.0
    %1511 = vmatpush1.msra.mxu0 0.0
    %1512 = vmatprep.subr.mxu0 0.0
    %1513 = vmatpush1.msra.mxu0 0.0
    %1514 = vmatprep.subr.mxu0 0.0
    %1515 = vmatpush1.msra.mxu0 0.0
    %1516 = vmatprep.subr.mxu0 0.0
    %1517 = vmatpush1.msra.mxu0 0.0
    %1518 = vmatprep.subr.mxu0 0.0
    %1519 = vmatpush1.msra.mxu0 0.0
    %1520 = vmatprep.subr.mxu0 0.0
    %1521 = vmatpush1.msra.mxu0 0.0
    %1522 = vmatprep.subr.mxu0 0.0
    %1523 = vmatpush1.msra.mxu0 0.0
    %1524 = vmatprep.subr.mxu0 0.0
    %1525 = vmatpush1.msra.mxu0 0.0
    %1526 = vmatprep.subr.mxu0 0.0
    %1527 = vmatpush1.msra.mxu0 0.0
    %1528 = vmatprep.subr.mxu0 0.0
    %1529 = vmatpush1.msra.mxu0 0.0
    %1530 = vmatprep.subr.mxu0 0.0
    %1531 = vmatpush1.msra.mxu0 0.0
    %1532 = vmatprep.subr.mxu0 0.0
    %1533 = vmatpush1.msra.mxu0 0.0
    %1534 = vmatprep.subr.mxu0 0.0
    %1535 = vmatpush1.msra.mxu0 0.0
    %1536 = vmatprep.subr.mxu0 0.0
    %1537 = vmatpush1.msra.mxu0 0.0
    %1538 = vmatprep.subr.mxu0 0.0
    %1539 = vmatpush1.msra.mxu0 0.0
    %1540 = vmatprep.subr.mxu0 0.0
    %1541 = vmatpush1.msra.mxu0 0.0
    %1542 = vmatprep.subr.mxu0 0.0
    %1543 = vmatpush1.msra.mxu0 0.0
    %1544 = vmatprep.subr.mxu0 0.0
    %1545 = vmatpush1.msra.mxu0 0.0
    %1546 = vmatprep.subr.mxu0 0.0
    %1547 = vmatpush1.msra.mxu0 0.0
    %1548 = vmatprep.subr.mxu0 0.0
    %1549 = vmatpush1.msra.mxu0 0.0
    %1550 = vmatprep.subr.mxu0 0.0
    %1551 = vmatpush1.msra.mxu0 0.0
    %1552 = vmatprep.subr.mxu0 0.0
    %1553 = vmatpush1.msra.mxu0 0.0
    %1554 = vmatprep.subr.mxu0 0.0
    %1555 = vmatpush1.msra.mxu0 0.0
    %1556 = vmatprep.subr.mxu0 0.0
    %1557 = vmatpush1.msra.mxu0 0.0
    %1558 = vmatprep.subr.mxu0 0.0
    %1559 = vmatpush1.msra.mxu0 0.0
    %1560 = vmatprep.mubr.f32.mxu0 0.0
    %1561 = vmatmul.mubr.f32.gmra.mrb[0].mxu0 %v1487
    %v1562 = vpop.f32.mrb[0].mxu0
    %v1563 = vadd.f32 0.0, %v1562
    %v1564 = vpop.f32.mrb[0].mxu0
    %1565 = vmatprep.mubr.f32.mxu0 0.0
    %1566 = vmatmul.mubr.f32.gmra.mrb[0].mxu0 %v1490
    %v1567 = vpop.f32.mrb[0].mxu0
    %v1568 = vadd.f32 0.0, %v1567
    %v1569 = vpop.f32.mrb[0].mxu0
    %1570 = vdwg.mxu0
    %v1571 = vadd.f32 %v1563, %v1568
    %v1572 = vxor.u32 %v1571, 2147483648
    %v1573 = vmul.f32 %v1572, 1.442695
    %v1574 = vpow.pop %v1573
    %v1575 = vadd.f32 %v1574, 1.0
    %v1576 = vrcp.pop %v1575
    %v1577 = vmul.f32 1.0, %v1576
    %v1578 = vlaneseq
    %v1579 = vshrl.u32 %v1578, 7
    %v1580 = vsub.s32 0, %v1579
    %v1581 = vrot.slane %v1577, %v1580
    %1583 = vbcast.lane.b32.xlu0 %v1581, 256
    %v1584 = vpop.permute.xlu0 %1583
    %s1586 = sor.u32 256, 8
    %1587 = vbcast.lane.b32.xlu0 %v1581, %s1586
    %v1588 = vpop.permute.xlu0 %1587
    %s1590 = sor.u32 256, 16
    %1591 = vbcast.lane.b32.xlu0 %v1581, %s1590
    %v1592 = vpop.permute.xlu0 %1591
    %s1594 = sor.u32 256, 24
    %1595 = vbcast.lane.b32.xlu0 %v1581, %s1594
    %v1596 = vpop.permute.xlu0 %1595
    %s1598 = sor.u32 256, 32
    %1599 = vbcast.lane.b32.xlu0 %v1581, %s1598
    %v1600 = vpop.permute.xlu0 %1599
    %s1602 = sor.u32 256, 40
    %1603 = vbcast.lane.b32.xlu0 %v1581, %s1602
    %v1604 = vpop.permute.xlu0 %1603
    %s1606 = sor.u32 256, 48
    %1607 = vbcast.lane.b32.xlu0 %v1581, %s1606
    %v1608 = vpop.permute.xlu0 %1607
    %s1610 = sor.u32 256, 56
    %1611 = vbcast.lane.b32.xlu0 %v1581, %s1610
    %v1612 = vpop.permute.xlu0 %1611
    %v1613 = vlaneseq
    %v1614 = vshrl.u32 %v1613, 7
    %v1615 = vsub.s32 1, %v1614
    %v1616 = vrot.slane %v1577, %v1615
    %1618 = vbcast.lane.b32.xlu0 %v1616, 256
    %v1619 = vpop.permute.xlu0 %1618
    %s1621 = sor.u32 256, 8
    %1622 = vbcast.lane.b32.xlu0 %v1616, %s1621
    %v1623 = vpop.permute.xlu0 %1622
    %s1625 = sor.u32 256, 16
    %1626 = vbcast.lane.b32.xlu0 %v1616, %s1625
    %v1627 = vpop.permute.xlu0 %1626
    %s1629 = sor.u32 256, 24
    %1630 = vbcast.lane.b32.xlu0 %v1616, %s1629
    %v1631 = vpop.permute.xlu0 %1630
    %s1633 = sor.u32 256, 32
    %1634 = vbcast.lane.b32.xlu0 %v1616, %s1633
    %v1635 = vpop.permute.xlu0 %1634
    %s1637 = sor.u32 256, 40
    %1638 = vbcast.lane.b32.xlu0 %v1616, %s1637
    %v1639 = vpop.permute.xlu0 %1638
    %s1641 = sor.u32 256, 48
    %1642 = vbcast.lane.b32.xlu0 %v1616, %s1641
    %v1643 = vpop.permute.xlu0 %1642
    %s1645 = sor.u32 256, 56
    %1646 = vbcast.lane.b32.xlu0 %v1616, %s1645
    %v1647 = vpop.permute.xlu0 %1646
    %v1648 = vlaneseq
    %v1649 = vshrl.u32 %v1648, 7
    %v1650 = vsub.s32 2, %v1649
    %v1651 = vrot.slane %v1577, %v1650
    %1653 = vbcast.lane.b32.xlu0 %v1651, 256
    %v1654 = vpop.permute.xlu0 %1653
    %s1656 = sor.u32 256, 8
    %1657 = vbcast.lane.b32.xlu0 %v1651, %s1656
    %v1658 = vpop.permute.xlu0 %1657
    %s1660 = sor.u32 256, 16
    %1661 = vbcast.lane.b32.xlu0 %v1651, %s1660
    %v1662 = vpop.permute.xlu0 %1661
    %s1664 = sor.u32 256, 24
    %1665 = vbcast.lane.b32.xlu0 %v1651, %s1664
    %v1666 = vpop.permute.xlu0 %1665
    %s1668 = sor.u32 256, 32
    %1669 = vbcast.lane.b32.xlu0 %v1651, %s1668
    %v1670 = vpop.permute.xlu0 %1669
    %s1672 = sor.u32 256, 40
    %1673 = vbcast.lane.b32.xlu0 %v1651, %s1672
    %v1674 = vpop.permute.xlu0 %1673
    %s1676 = sor.u32 256, 48
    %1677 = vbcast.lane.b32.xlu0 %v1651, %s1676
    %v1678 = vpop.permute.xlu0 %1677
    %s1680 = sor.u32 256, 56
    %1681 = vbcast.lane.b32.xlu0 %v1651, %s1680
    %v1682 = vpop.permute.xlu0 %1681
    %v1683 = vlaneseq
    %v1684 = vshrl.u32 %v1683, 7
    %v1685 = vsub.s32 3, %v1684
    %v1686 = vrot.slane %v1577, %v1685
    %1688 = vbcast.lane.b32.xlu0 %v1686, 256
    %v1689 = vpop.permute.xlu0 %1688
    %s1691 = sor.u32 256, 8
    %1692 = vbcast.lane.b32.xlu0 %v1686, %s1691
    %v1693 = vpop.permute.xlu0 %1692
    %s1695 = sor.u32 256, 16
    %1696 = vbcast.lane.b32.xlu0 %v1686, %s1695
    %v1697 = vpop.permute.xlu0 %1696
    %s1699 = sor.u32 256, 24
    %1700 = vbcast.lane.b32.xlu0 %v1686, %s1699
    %v1701 = vpop.permute.xlu0 %1700
    %s1703 = sor.u32 256, 32
    %1704 = vbcast.lane.b32.xlu0 %v1686, %s1703
    %v1705 = vpop.permute.xlu0 %1704
    %s1707 = sor.u32 256, 40
    %1708 = vbcast.lane.b32.xlu0 %v1686, %s1707
    %v1709 = vpop.permute.xlu0 %1708
    %s1711 = sor.u32 256, 48
    %1712 = vbcast.lane.b32.xlu0 %v1686, %s1711
    %v1713 = vpop.permute.xlu0 %1712
    %s1715 = sor.u32 256, 56
    %1716 = vbcast.lane.b32.xlu0 %v1686, %s1715
    %v1717 = vpop.permute.xlu0 %1716
    %v1718 = vlaneseq
    %v1719 = vshrl.u32 %v1718, 7
    %v1720 = vsub.s32 4, %v1719
    %v1721 = vrot.slane %v1577, %v1720
    %1723 = vbcast.lane.b32.xlu0 %v1721, 256
    %v1724 = vpop.permute.xlu0 %1723
    %s1726 = sor.u32 256, 8
    %1727 = vbcast.lane.b32.xlu0 %v1721, %s1726
    %v1728 = vpop.permute.xlu0 %1727
    %s1730 = sor.u32 256, 16
    %1731 = vbcast.lane.b32.xlu0 %v1721, %s1730
    %v1732 = vpop.permute.xlu0 %1731
    %s1734 = sor.u32 256, 24
    %1735 = vbcast.lane.b32.xlu0 %v1721, %s1734
    %v1736 = vpop.permute.xlu0 %1735
    %s1738 = sor.u32 256, 32
    %1739 = vbcast.lane.b32.xlu0 %v1721, %s1738
    %v1740 = vpop.permute.xlu0 %1739
    %s1742 = sor.u32 256, 40
    %1743 = vbcast.lane.b32.xlu0 %v1721, %s1742
    %v1744 = vpop.permute.xlu0 %1743
    %s1746 = sor.u32 256, 48
    %1747 = vbcast.lane.b32.xlu0 %v1721, %s1746
    %v1748 = vpop.permute.xlu0 %1747
    %s1750 = sor.u32 256, 56
    %1751 = vbcast.lane.b32.xlu0 %v1721, %s1750
    %v1752 = vpop.permute.xlu0 %1751
    %v1753 = vlaneseq
    %v1754 = vshrl.u32 %v1753, 7
    %v1755 = vsub.s32 5, %v1754
    %v1756 = vrot.slane %v1577, %v1755
    %1758 = vbcast.lane.b32.xlu0 %v1756, 256
    %v1759 = vpop.permute.xlu0 %1758
    %s1761 = sor.u32 256, 8
    %1762 = vbcast.lane.b32.xlu0 %v1756, %s1761
    %v1763 = vpop.permute.xlu0 %1762
    %s1765 = sor.u32 256, 16
    %1766 = vbcast.lane.b32.xlu0 %v1756, %s1765
    %v1767 = vpop.permute.xlu0 %1766
    %s1769 = sor.u32 256, 24
    %1770 = vbcast.lane.b32.xlu0 %v1756, %s1769
    %v1771 = vpop.permute.xlu0 %1770
    %s1773 = sor.u32 256, 32
    %1774 = vbcast.lane.b32.xlu0 %v1756, %s1773
    %v1775 = vpop.permute.xlu0 %1774
    %s1777 = sor.u32 256, 40
    %1778 = vbcast.lane.b32.xlu0 %v1756, %s1777
    %v1779 = vpop.permute.xlu0 %1778
    %s1781 = sor.u32 256, 48
    %1782 = vbcast.lane.b32.xlu0 %v1756, %s1781
    %v1783 = vpop.permute.xlu0 %1782
    %s1785 = sor.u32 256, 56
    %1786 = vbcast.lane.b32.xlu0 %v1756, %s1785
    %v1787 = vpop.permute.xlu0 %1786
    %v1788 = vlaneseq
    %v1789 = vshrl.u32 %v1788, 7
    %v1790 = vsub.s32 6, %v1789
    %v1791 = vrot.slane %v1577, %v1790
    %1793 = vbcast.lane.b32.xlu0 %v1791, 256
    %v1794 = vpop.permute.xlu0 %1793
    %s1796 = sor.u32 256, 8
    %1797 = vbcast.lane.b32.xlu0 %v1791, %s1796
    %v1798 = vpop.permute.xlu0 %1797
    %s1800 = sor.u32 256, 16
    %1801 = vbcast.lane.b32.xlu0 %v1791, %s1800
    %v1802 = vpop.permute.xlu0 %1801
    %s1804 = sor.u32 256, 24
    %1805 = vbcast.lane.b32.xlu0 %v1791, %s1804
    %v1806 = vpop.permute.xlu0 %1805
    %s1808 = sor.u32 256, 32
    %1809 = vbcast.lane.b32.xlu0 %v1791, %s1808
    %v1810 = vpop.permute.xlu0 %1809
    %s1812 = sor.u32 256, 40
    %1813 = vbcast.lane.b32.xlu0 %v1791, %s1812
    %v1814 = vpop.permute.xlu0 %1813
    %s1816 = sor.u32 256, 48
    %1817 = vbcast.lane.b32.xlu0 %v1791, %s1816
    %v1818 = vpop.permute.xlu0 %1817
    %s1820 = sor.u32 256, 56
    %1821 = vbcast.lane.b32.xlu0 %v1791, %s1820
    %v1822 = vpop.permute.xlu0 %1821
    %v1823 = vlaneseq
    %v1824 = vshrl.u32 %v1823, 7
    %v1825 = vsub.s32 7, %v1824
    %v1826 = vrot.slane %v1577, %v1825
    %1828 = vbcast.lane.b32.xlu0 %v1826, 256
    %v1829 = vpop.permute.xlu0 %1828
    %s1831 = sor.u32 256, 8
    %1832 = vbcast.lane.b32.xlu0 %v1826, %s1831
    %v1833 = vpop.permute.xlu0 %1832
    %s1835 = sor.u32 256, 16
    %1836 = vbcast.lane.b32.xlu0 %v1826, %s1835
    %v1837 = vpop.permute.xlu0 %1836
    %s1839 = sor.u32 256, 24
    %1840 = vbcast.lane.b32.xlu0 %v1826, %s1839
    %v1841 = vpop.permute.xlu0 %1840
    %s1843 = sor.u32 256, 32
    %1844 = vbcast.lane.b32.xlu0 %v1826, %s1843
    %v1845 = vpop.permute.xlu0 %1844
    %s1847 = sor.u32 256, 40
    %1848 = vbcast.lane.b32.xlu0 %v1826, %s1847
    %v1849 = vpop.permute.xlu0 %1848
    %s1851 = sor.u32 256, 48
    %1852 = vbcast.lane.b32.xlu0 %v1826, %s1851
    %v1853 = vpop.permute.xlu0 %1852
    %s1855 = sor.u32 256, 56
    %1856 = vbcast.lane.b32.xlu0 %v1826, %s1855
    %v1857 = vpop.permute.xlu0 %1856
    %v1858 = vmul.f32 %v29, %v1584
    %v1859 = vmul.f32 %v30, %v1584
    %v1860 = vmul.f32 %v31, %v1588
    %v1861 = vmul.f32 %v32, %v1588
    %v1862 = vmul.f32 %v33, %v1592
    %v1863 = vmul.f32 %v34, %v1592
    %v1864 = vmul.f32 %v35, %v1596
    %v1865 = vmul.f32 %v36, %v1596
    %v1866 = vmul.f32 %v37, %v1600
    %v1867 = vmul.f32 %v38, %v1600
    %v1868 = vmul.f32 %v39, %v1604
    %v1869 = vmul.f32 %v40, %v1604
    %v1870 = vmul.f32 %v41, %v1608
    %v1871 = vmul.f32 %v42, %v1608
    %v1872 = vmul.f32 %v43, %v1612
    %v1873 = vmul.f32 %v44, %v1612
    %v1874 = vmul.f32 %v45, %v1619
    %v1875 = vmul.f32 %v46, %v1619
    %v1876 = vmul.f32 %v47, %v1623
    %v1877 = vmul.f32 %v48, %v1623
    %v1878 = vmul.f32 %v49, %v1627
    %v1879 = vmul.f32 %v50, %v1627
    %v1880 = vmul.f32 %v51, %v1631
    %v1881 = vmul.f32 %v52, %v1631
    %v1882 = vmul.f32 %v53, %v1635
    %v1883 = vmul.f32 %v54, %v1635
    %v1884 = vmul.f32 %v55, %v1639
    %v1885 = vmul.f32 %v56, %v1639
    %v1886 = vmul.f32 %v57, %v1643
    %v1887 = vmul.f32 %v58, %v1643
    %v1888 = vmul.f32 %v59, %v1647
    %v1889 = vmul.f32 %v60, %v1647
    %v1890 = vmul.f32 %v61, %v1654
    %v1891 = vmul.f32 %v62, %v1654
    %v1892 = vmul.f32 %v63, %v1658
    %v1893 = vmul.f32 %v64, %v1658
    %v1894 = vmul.f32 %v65, %v1662
    %v1895 = vmul.f32 %v66, %v1662
    %v1896 = vmul.f32 %v67, %v1666
    %v1897 = vmul.f32 %v68, %v1666
    %v1898 = vmul.f32 %v69, %v1670
    %v1899 = vmul.f32 %v70, %v1670
    %v1900 = vmul.f32 %v71, %v1674
    %v1901 = vmul.f32 %v72, %v1674
    %v1902 = vmul.f32 %v73, %v1678
    %v1903 = vmul.f32 %v74, %v1678
    %v1904 = vmul.f32 %v75, %v1682
    %v1905 = vmul.f32 %v76, %v1682
    %v1906 = vmul.f32 %v77, %v1689
    %v1907 = vmul.f32 %v78, %v1689
    %v1908 = vmul.f32 %v79, %v1693
    %v1909 = vmul.f32 %v80, %v1693
    %v1910 = vmul.f32 %v81, %v1697
    %v1911 = vmul.f32 %v82, %v1697
    %v1912 = vmul.f32 %v83, %v1701
    %v1913 = vmul.f32 %v84, %v1701
    %v1914 = vmul.f32 %v85, %v1705
    %v1915 = vmul.f32 %v86, %v1705
    %v1916 = vmul.f32 %v87, %v1709
    %v1917 = vmul.f32 %v88, %v1709
    %v1918 = vmul.f32 %v89, %v1713
    %v1919 = vmul.f32 %v90, %v1713
    %v1920 = vmul.f32 %v91, %v1717
    %v1921 = vmul.f32 %v92, %v1717
    %v1922 = vmul.f32 %v93, %v1724
    %v1923 = vmul.f32 %v94, %v1724
    %v1924 = vmul.f32 %v95, %v1728
    %v1925 = vmul.f32 %v96, %v1728
    %v1926 = vmul.f32 %v97, %v1732
    %v1927 = vmul.f32 %v98, %v1732
    %v1928 = vmul.f32 %v99, %v1736
    %v1929 = vmul.f32 %v100, %v1736
    %v1930 = vmul.f32 %v101, %v1740
    %v1931 = vmul.f32 %v102, %v1740
    %v1932 = vmul.f32 %v103, %v1744
    %v1933 = vmul.f32 %v104, %v1744
    %v1934 = vmul.f32 %v105, %v1748
    %v1935 = vmul.f32 %v106, %v1748
    %v1936 = vmul.f32 %v107, %v1752
    %v1937 = vmul.f32 %v108, %v1752
    %v1938 = vmul.f32 %v109, %v1759
    %v1939 = vmul.f32 %v110, %v1759
    %v1940 = vmul.f32 %v111, %v1763
    %v1941 = vmul.f32 %v112, %v1763
    %v1942 = vmul.f32 %v113, %v1767
    %v1943 = vmul.f32 %v114, %v1767
    %v1944 = vmul.f32 %v115, %v1771
    %v1945 = vmul.f32 %v116, %v1771
    %v1946 = vmul.f32 %v117, %v1775
    %v1947 = vmul.f32 %v118, %v1775
    %v1948 = vmul.f32 %v119, %v1779
    %v1949 = vmul.f32 %v120, %v1779
    %v1950 = vmul.f32 %v121, %v1783
    %v1951 = vmul.f32 %v122, %v1783
    %v1952 = vmul.f32 %v123, %v1787
    %v1953 = vmul.f32 %v124, %v1787
    %v1954 = vmul.f32 %v125, %v1794
    %v1955 = vmul.f32 %v126, %v1794
    %v1956 = vmul.f32 %v127, %v1798
    %v1957 = vmul.f32 %v128, %v1798
    %v1958 = vmul.f32 %v129, %v1802
    %v1959 = vmul.f32 %v130, %v1802
    %v1960 = vmul.f32 %v131, %v1806
    %v1961 = vmul.f32 %v132, %v1806
    %v1962 = vmul.f32 %v133, %v1810
    %v1963 = vmul.f32 %v134, %v1810
    %v1964 = vmul.f32 %v135, %v1814
    %v1965 = vmul.f32 %v136, %v1814
    %v1966 = vmul.f32 %v137, %v1818
    %v1967 = vmul.f32 %v138, %v1818
    %v1968 = vmul.f32 %v139, %v1822
    %v1969 = vmul.f32 %v140, %v1822
    %v1970 = vmul.f32 %v141, %v1829
    %v1971 = vmul.f32 %v142, %v1829
    %v1972 = vmul.f32 %v143, %v1833
    %v1973 = vmul.f32 %v144, %v1833
    %v1974 = vmul.f32 %v145, %v1837
    %v1975 = vmul.f32 %v146, %v1837
    %v1976 = vmul.f32 %v147, %v1841
    %v1977 = vmul.f32 %v148, %v1841
    %v1978 = vmul.f32 %v149, %v1845
    %v1979 = vmul.f32 %v150, %v1845
    %v1980 = vmul.f32 %v151, %v1849
    %v1981 = vmul.f32 %v152, %v1849
    %v1982 = vmul.f32 %v153, %v1853
    %v1983 = vmul.f32 %v154, %v1853
    %v1984 = vmul.f32 %v155, %v1857
    %v1985 = vmul.f32 %v156, %v1857
    %1986 = vst [vmem:[#allocation5] sm:$0xff] %v1858
    %1987 = vst [vmem:[#allocation5 + $0x8] sm:$0xff] %v1859
    %1988 = vst [vmem:[#allocation5 + $0x10] sm:$0xff] %v1860
    %1989 = vst [vmem:[#allocation5 + $0x18] sm:$0xff] %v1861
    %1990 = vst [vmem:[#allocation5 + $0x20] sm:$0xff] %v1862
    %1991 = vst [vmem:[#allocation5 + $0x28] sm:$0xff] %v1863
    %1992 = vst [vmem:[#allocation5 + $0x30] sm:$0xff] %v1864
    %1993 = vst [vmem:[#allocation5 + $0x38] sm:$0xff] %v1865
    %1994 = vst [vmem:[#allocation5 + $0x40] sm:$0xff] %v1866
    %1995 = vst [vmem:[#allocation5 + $0x48] sm:$0xff] %v1867
    %1996 = vst [vmem:[#allocation5 + $0x50] sm:$0xff] %v1868
    %1997 = vst [vmem:[#allocation5 + $0x58] sm:$0xff] %v1869
    %1998 = vst [vmem:[#allocation5 + $0x60] sm:$0xff] %v1870
    %1999 = vst [vmem:[#allocation5 + $0x68] sm:$0xff] %v1871
    %2000 = vst [vmem:[#allocation5 + $0x70] sm:$0xff] %v1872
    %2001 = vst [vmem:[#allocation5 + $0x78] sm:$0xff] %v1873
    %2002 = vst [vmem:[#allocation5 + $0x80] sm:$0xff] %v1874
    %2003 = vst [vmem:[#allocation5 + $0x88] sm:$0xff] %v1875
    %2004 = vst [vmem:[#allocation5 + $0x90] sm:$0xff] %v1876
    %2005 = vst [vmem:[#allocation5 + $0x98] sm:$0xff] %v1877
    %2006 = vst [vmem:[#allocation5 + $0xa0] sm:$0xff] %v1878
    %2007 = vst [vmem:[#allocation5 + $0xa8] sm:$0xff] %v1879
    %2008 = vst [vmem:[#allocation5 + $0xb0] sm:$0xff] %v1880
    %2009 = vst [vmem:[#allocation5 + $0xb8] sm:$0xff] %v1881
    %2010 = vst [vmem:[#allocation5 + $0xc0] sm:$0xff] %v1882
    %2011 = vst [vmem:[#allocation5 + $0xc8] sm:$0xff] %v1883
    %2012 = vst [vmem:[#allocation5 + $0xd0] sm:$0xff] %v1884
    %2013 = vst [vmem:[#allocation5 + $0xd8] sm:$0xff] %v1885
    %2014 = vst [vmem:[#allocation5 + $0xe0] sm:$0xff] %v1886
    %2015 = vst [vmem:[#allocation5 + $0xe8] sm:$0xff] %v1887
    %2016 = vst [vmem:[#allocation5 + $0xf0] sm:$0xff] %v1888
    %2017 = vst [vmem:[#allocation5 + $0xf8] sm:$0xff] %v1889
    %2018 = vst [vmem:[#allocation5 + $0x100] sm:$0xff] %v1890
    %2019 = vst [vmem:[#allocation5 + $0x108] sm:$0xff] %v1891
    %2020 = vst [vmem:[#allocation5 + $0x110] sm:$0xff] %v1892
    %2021 = vst [vmem:[#allocation5 + $0x118] sm:$0xff] %v1893
    %2022 = vst [vmem:[#allocation5 + $0x120] sm:$0xff] %v1894
    %2023 = vst [vmem:[#allocation5 + $0x128] sm:$0xff] %v1895
    %2024 = vst [vmem:[#allocation5 + $0x130] sm:$0xff] %v1896
    %2025 = vst [vmem:[#allocation5 + $0x138] sm:$0xff] %v1897
    %2026 = vst [vmem:[#allocation5 + $0x140] sm:$0xff] %v1898
    %2027 = vst [vmem:[#allocation5 + $0x148] sm:$0xff] %v1899
    %2028 = vst [vmem:[#allocation5 + $0x150] sm:$0xff] %v1900
    %2029 = vst [vmem:[#allocation5 + $0x158] sm:$0xff] %v1901
    %2030 = vst [vmem:[#allocation5 + $0x160] sm:$0xff] %v1902
    %2031 = vst [vmem:[#allocation5 + $0x168] sm:$0xff] %v1903
    %2032 = vst [vmem:[#allocation5 + $0x170] sm:$0xff] %v1904
    %2033 = vst [vmem:[#allocation5 + $0x178] sm:$0xff] %v1905
    %2034 = vst [vmem:[#allocation5 + $0x180] sm:$0xff] %v1906
    %2035 = vst [vmem:[#allocation5 + $0x188] sm:$0xff] %v1907
    %2036 = vst [vmem:[#allocation5 + $0x190] sm:$0xff] %v1908
    %2037 = vst [vmem:[#allocation5 + $0x198] sm:$0xff] %v1909
    %2038 = vst [vmem:[#allocation5 + $0x1a0] sm:$0xff] %v1910
    %2039 = vst [vmem:[#allocation5 + $0x1a8] sm:$0xff] %v1911
    %2040 = vst [vmem:[#allocation5 + $0x1b0] sm:$0xff] %v1912
    %2041 = vst [vmem:[#allocation5 + $0x1b8] sm:$0xff] %v1913
    %2042 = vst [vmem:[#allocation5 + $0x1c0] sm:$0xff] %v1914
    %2043 = vst [vmem:[#allocation5 + $0x1c8] sm:$0xff] %v1915
    %2044 = vst [vmem:[#allocation5 + $0x1d0] sm:$0xff] %v1916
    %2045 = vst [vmem:[#allocation5 + $0x1d8] sm:$0xff] %v1917
    %2046 = vst [vmem:[#allocation5 + $0x1e0] sm:$0xff] %v1918
    %2047 = vst [vmem:[#allocation5 + $0x1e8] sm:$0xff] %v1919
    %2048 = vst [vmem:[#allocation5 + $0x1f0] sm:$0xff] %v1920
    %2049 = vst [vmem:[#allocation5 + $0x1f8] sm:$0xff] %v1921
    %2050 = vst [vmem:[#allocation5 + $0x200] sm:$0xff] %v1922
    %2051 = vst [vmem:[#allocation5 + $0x208] sm:$0xff] %v1923
    %2052 = vst [vmem:[#allocation5 + $0x210] sm:$0xff] %v1924
    %2053 = vst [vmem:[#allocation5 + $0x218] sm:$0xff] %v1925
    %2054 = vst [vmem:[#allocation5 + $0x220] sm:$0xff] %v1926
    %2055 = vst [vmem:[#allocation5 + $0x228] sm:$0xff] %v1927
    %2056 = vst [vmem:[#allocation5 + $0x230] sm:$0xff] %v1928
    %2057 = vst [vmem:[#allocation5 + $0x238] sm:$0xff] %v1929
    %2058 = vst [vmem:[#allocation5 + $0x240] sm:$0xff] %v1930
    %2059 = vst [vmem:[#allocation5 + $0x248] sm:$0xff] %v1931
    %2060 = vst [vmem:[#allocation5 + $0x250] sm:$0xff] %v1932
    %2061 = vst [vmem:[#allocation5 + $0x258] sm:$0xff] %v1933
    %2062 = vst [vmem:[#allocation5 + $0x260] sm:$0xff] %v1934
    %2063 = vst [vmem:[#allocation5 + $0x268] sm:$0xff] %v1935
    %2064 = vst [vmem:[#allocation5 + $0x270] sm:$0xff] %v1936
    %2065 = vst [vmem:[#allocation5 + $0x278] sm:$0xff] %v1937
    %2066 = vst [vmem:[#allocation5 + $0x280] sm:$0xff] %v1938
    %2067 = vst [vmem:[#allocation5 + $0x288] sm:$0xff] %v1939
    %2068 = vst [vmem:[#allocation5 + $0x290] sm:$0xff] %v1940
    %2069 = vst [vmem:[#allocation5 + $0x298] sm:$0xff] %v1941
    %2070 = vst [vmem:[#allocation5 + $0x2a0] sm:$0xff] %v1942
    %2071 = vst [vmem:[#allocation5 + $0x2a8] sm:$0xff] %v1943
    %2072 = vst [vmem:[#allocation5 + $0x2b0] sm:$0xff] %v1944
    %2073 = vst [vmem:[#allocation5 + $0x2b8] sm:$0xff] %v1945
    %2074 = vst [vmem:[#allocation5 + $0x2c0] sm:$0xff] %v1946
    %2075 = vst [vmem:[#allocation5 + $0x2c8] sm:$0xff] %v1947
    %2076 = vst [vmem:[#allocation5 + $0x2d0] sm:$0xff] %v1948
    %2077 = vst [vmem:[#allocation5 + $0x2d8] sm:$0xff] %v1949
    %2078 = vst [vmem:[#allocation5 + $0x2e0] sm:$0xff] %v1950
    %2079 = vst [vmem:[#allocation5 + $0x2e8] sm:$0xff] %v1951
    %2080 = vst [vmem:[#allocation5 + $0x2f0] sm:$0xff] %v1952
    %2081 = vst [vmem:[#allocation5 + $0x2f8] sm:$0xff] %v1953
    %2082 = vst [vmem:[#allocation5 + $0x300] sm:$0xff] %v1954
    %2083 = vst [vmem:[#allocation5 + $0x308] sm:$0xff] %v1955
    %2084 = vst [vmem:[#allocation5 + $0x310] sm:$0xff] %v1956
    %2085 = vst [vmem:[#allocation5 + $0x318] sm:$0xff] %v1957
    %2086 = vst [vmem:[#allocation5 + $0x320] sm:$0xff] %v1958
    %2087 = vst [vmem:[#allocation5 + $0x328] sm:$0xff] %v1959
    %2088 = vst [vmem:[#allocation5 + $0x330] sm:$0xff] %v1960
    %2089 = vst [vmem:[#allocation5 + $0x338] sm:$0xff] %v1961
    %2090 = vst [vmem:[#allocation5 + $0x340] sm:$0xff] %v1962
    %2091 = vst [vmem:[#allocation5 + $0x348] sm:$0xff] %v1963
    %2092 = vst [vmem:[#allocation5 + $0x350] sm:$0xff] %v1964
    %2093 = vst [vmem:[#allocation5 + $0x358] sm:$0xff] %v1965
    %2094 = vst [vmem:[#allocation5 + $0x360] sm:$0xff] %v1966
    %2095 = vst [vmem:[#allocation5 + $0x368] sm:$0xff] %v1967
    %2096 = vst [vmem:[#allocation5 + $0x370] sm:$0xff] %v1968
    %2097 = vst [vmem:[#allocation5 + $0x378] sm:$0xff] %v1969
    %2098 = vst [vmem:[#allocation5 + $0x380] sm:$0xff] %v1970
    %2099 = vst [vmem:[#allocation5 + $0x388] sm:$0xff] %v1971
    %2100 = vst [vmem:[#allocation5 + $0x390] sm:$0xff] %v1972
    %2101 = vst [vmem:[#allocation5 + $0x398] sm:$0xff] %v1973
    %2102 = vst [vmem:[#allocation5 + $0x3a0] sm:$0xff] %v1974
    %2103 = vst [vmem:[#allocation5 + $0x3a8] sm:$0xff] %v1975
    %2104 = vst [vmem:[#allocation5 + $0x3b0] sm:$0xff] %v1976
    %2105 = vst [vmem:[#allocation5 + $0x3b8] sm:$0xff] %v1977
    %2106 = vst [vmem:[#allocation5 + $0x3c0] sm:$0xff] %v1978
    %2107 = vst [vmem:[#allocation5 + $0x3c8] sm:$0xff] %v1979
    %2108 = vst [vmem:[#allocation5 + $0x3d0] sm:$0xff] %v1980
    %2109 = vst [vmem:[#allocation5 + $0x3d8] sm:$0xff] %v1981
    %2110 = vst [vmem:[#allocation5 + $0x3e0] sm:$0xff] %v1982
    %2111 = vst [vmem:[#allocation5 + $0x3e8] sm:$0xff] %v1983
    %2112 = vst [vmem:[#allocation5 + $0x3f0] sm:$0xff] %v1984
    %2113 = vst [vmem:[#allocation5 + $0x3f8] sm:$0xff] %v1985
    // Predicated region
    $region18: #{tpu_custom_call.1} parent=1 // pred_check
      _
    $region19: #{tpu_custom_call.1} parent=1 // pred_check_branch
      %2115 = sbr.rel (0) target = $region21
    $region20: #{tpu_custom_call.1} parent=1 // pred_region
      %s2117 = ssub.s32 16384, 16384
      %2118 = vsyncadd [#allocation4], %s2117
      %s2119 = sshll.u32 [#allocation5], 4
      %s2120 = int_to_ptr.vmem [resolvable:$true] %s2119
      %2125 = dma.vmem_to_hbm [thread:$0]  %s2120, 16384, %s3, [#allocation4], 256, 256, 16
    $region21: #{tpu_custom_call.1} parent=1 // pred_fallthru
      _
    // Predicated region
    $region22: #{tpu_custom_call.1} parent=1 // pred_check
      _
    $region23: #{tpu_custom_call.1} parent=1 // pred_check_branch
      %2127 = sbr.rel (0) target = $region25
    $region24: #{tpu_custom_call.1} parent=1 // pred_region
      %2128 = dma.done [#allocation4], 16384
    $region25: #{tpu_custom_call.1} parent=1 // pred_fallthru
      _
    %2129 = vsyncpa [#allocation3], 1
    %2130 = vsyncpa [#allocation4], 1

</llo_original>
